<compile_context>
chip_gen: v7x
topology: tpu7x:2x2x1
jax: 0.10.0
libtpu: 0.0.40
codegen_flags: <defaults>
</compile_context>

<pallas_src>
import jax
import jax.numpy as jnp
from jax.experimental import pallas as pl
from jax.experimental.pallas import tpu as pltpu

IN_DIM = 1024
HID_DIM = 512
OUT_DIM = 1


def _round_up(n, m):
    return ((n + m - 1) // m) * m


def reward_model_kernel(x_ref, w1_ref, b1_ref, w2_ref, b2_ref, o_ref):
    # fc1: bf16 MXU matmul with f32 accumulation; bias + ReLU on the VPU.
    h = jnp.dot(x_ref[...], w1_ref[...], preferred_element_type=jnp.float32)
    h = jnp.maximum(h + b1_ref[...], 0.0)                       # (TILE_B, HID)

    # fc2 (out_dim == 1): VPU multiply + lane reduction instead of an N=1 MXU matmul.
    logit = jnp.sum(h * w2_ref[...], axis=-1, keepdims=True)    # (TILE_B, 1)
    logit = logit + b2_ref[...]                                 # (1,1) broadcast add
    o_ref[...] = jax.nn.sigmoid(logit).astype(o_ref.dtype)


def reward_model_forward(x, w1, b1, w2, b2, *, tile_b=512):
    """x: [B, 1024]; w1: [1024, 512]; b1: [1, 512]; w2: [512, 1]; b2: [1, 1]."""
    B = x.shape[0]
    assert x.shape[1] == IN_DIM

    tile_b = _round_up(max(8, min(int(tile_b), _round_up(B, 8))), 8)
    b_pad = _round_up(B, tile_b)
    grid = (b_pad // tile_b,)

    # bf16 on the HBM-heavy operands; biases and the tiny fc2 weight stay f32.
    x_bf = x.astype(jnp.bfloat16)
    if b_pad != B:
        x_bf = jnp.pad(x_bf, ((0, b_pad - B), (0, 0)))
    w1_bf = jnp.asarray(w1, jnp.bfloat16)
    b1_row = jnp.asarray(b1, jnp.float32).reshape(1, HID_DIM)
    w2_row = jnp.asarray(w2, jnp.float32).reshape(1, HID_DIM)
    b2_sc = jnp.asarray(b2, jnp.float32).reshape(1, 1)

    # VMEM budget: resident weights (+ 2x for buffering slack) + double-buffered x / out
    # tiles + generous headroom; clamped to the scoped default ceiling.
    resident = IN_DIM * HID_DIM * 2 + 2 * HID_DIM * 4 + 4
    streamed = 2 * tile_b * IN_DIM * 2 + 2 * tile_b * OUT_DIM * 4
    vmem_limit = min(32 << 20, 2 * resident + streamed + (4 << 20))

    cost = pl.CostEstimate(
        flops=2 * b_pad * IN_DIM * HID_DIM + 2 * b_pad * HID_DIM,
        transcendentals=b_pad,
        bytes_accessed=(x_bf.size * 2) + IN_DIM * HID_DIM * 2
        + 2 * HID_DIM * 4 + 4 + b_pad * OUT_DIM * 4,
    )

    out = pl.pallas_call(
        reward_model_kernel,
        out_shape=jax.ShapeDtypeStruct((b_pad, OUT_DIM), jnp.float32),
        grid_spec=pltpu.PrefetchScalarGridSpec(
            num_scalar_prefetch=0,
            grid=grid,
            in_specs=[
                pl.BlockSpec((tile_b, IN_DIM), lambda i: (i, 0)),   # x tile (streamed)
                pl.BlockSpec((IN_DIM, HID_DIM), lambda i: (0, 0)),  # w1 (VMEM-resident)
                pl.BlockSpec((1, HID_DIM), lambda i: (0, 0)),       # b1 (resident)
                pl.BlockSpec((1, HID_DIM), lambda i: (0, 0)),       # w2 row (resident)
                pl.BlockSpec((1, 1), lambda i: (0, 0)),             # b2 (1,1) resident
            ],
            out_specs=pl.BlockSpec((tile_b, OUT_DIM), lambda i: (i, 0)),
        ),
        compiler_params=pltpu.CompilerParams(
            dimension_semantics=("parallel",),
            vmem_limit_bytes=vmem_limit,
        ),
        cost_estimate=cost,
    )(x_bf, w1_bf, b1_row, w2_row, b2_sc)

    return out[:B]


def init_params(key):
    # Deterministic synthetic init (PyTorch-like uniform(-1/sqrt(fan_in), 1/sqrt(fan_in))).
    k1, k2, k3, k4 = jax.random.split(key, 4)
    bound1 = 1.0 / jnp.sqrt(IN_DIM)
    bound2 = 1.0 / jnp.sqrt(HID_DIM)
    # Stored as [in, out] (transposed relative to torch's nn.Linear weight [out, in]).
    w1 = jax.random.uniform(k1, (IN_DIM, HID_DIM), jnp.float32, -bound1, bound1)
    b1 = jax.random.uniform(k2, (1, HID_DIM), jnp.float32, -bound1, bound1)
    w2 = jax.random.uniform(k3, (HID_DIM, OUT_DIM), jnp.float32, -bound2, bound2)
    b2 = jax.random.uniform(k4, (1, OUT_DIM), jnp.float32, -bound2, bound2)
    return w1, b1, w2, b2


def reference_forward(x, w1, b1, w2, b2):
    # Same numerics as the kernel: bf16 inputs to the big matmul, f32 accumulation.
    h = jnp.dot(x.astype(jnp.bfloat16), w1.astype(jnp.bfloat16),
                preferred_element_type=jnp.float32)
    h = jnp.maximum(h + b1.reshape(1, HID_DIM), 0.0)
    logit = jnp.dot(h, w2.reshape(HID_DIM, OUT_DIM)) + b2.reshape(1, OUT_DIM)
    return jax.nn.sigmoid(logit)


if __name__ == "__main__":
    key = jax.random.PRNGKey(0)
    kx, kp = jax.random.split(key)

    w1, b1, w2, b2 = init_params(kp)

    # Small batch: single tile, no padding.
    B = 8
    x = jax.random.normal(kx, (B, IN_DIM), jnp.float32)
    out = jax.block_until_ready(reward_model_forward(x, w1, b1, w2, b2))
    ref = reference_forward(x, w1, b1, w2, b2)
    assert out.shape == (B, OUT_DIM)
    assert jnp.allclose(out, ref, atol=5e-4, rtol=5e-4), "mismatch vs reference (B=8)"

    # Larger, non-multiple batch: exercises the batch grid + zero-padding path.
    B2 = 200
    x2 = jax.random.normal(jax.random.PRNGKey(1), (B2, IN_DIM), jnp.float32)
    out2 = jax.block_until_ready(reward_model_forward(x2, w1, b1, w2, b2, tile_b=128))
    ref2 = reference_forward(x2, w1, b1, w2, b2)
    assert out2.shape == (B2, OUT_DIM)
    assert jnp.allclose(out2, ref2, atol=5e-4, rtol=5e-4), "mismatch vs reference (B=200)"

    print("KERNEL_OK")
</pallas_src>

<mosaic_0001>
module attributes {stable_mosaic.version = 11 : i64} {
  func.func @reward_model_kernel(%arg0: i32, %arg1: memref<8x1024xbf16, #tpu.memory_space<vmem>>, %arg2: memref<1024x512xbf16, #tpu.memory_space<vmem>>, %arg3: memref<1x512xf32, #tpu.memory_space<vmem>>, %arg4: memref<1x512xf32, #tpu.memory_space<vmem>>, %arg5: memref<1x1xf32, #tpu.memory_space<vmem>>, %arg6: memref<8x1xf32, #tpu.memory_space<vmem>>) attributes {dimension_semantics = [#tpu.dimension_semantics<parallel>], iteration_bounds = array<i64: 1>, scalar_prefetch = 0 : i64, scratch_operands = 0 : i64, tpu.core_type = #tpu.core_type<tc>, window_params = [{transform_indices = @transform_0, window_bounds = array<i64: 8, 1024>}, {pipeline_mode = #tpu.pipeline_mode<synchronous>, transform_indices = @transform_1, window_bounds = array<i64: 1024, 512>}, {pipeline_mode = #tpu.pipeline_mode<synchronous>, transform_indices = @transform_2, window_bounds = array<i64: 1, 512>}, {pipeline_mode = #tpu.pipeline_mode<synchronous>, transform_indices = @transform_3, window_bounds = array<i64: 1, 512>}, {pipeline_mode = #tpu.pipeline_mode<synchronous>, transform_indices = @transform_4, window_bounds = array<i64: 1, 1>}, {transform_indices = @transform_5, window_bounds = array<i64: 8, 1>}]} {
    %c0 = arith.constant 0 : index
    %c0_0 = arith.constant 0 : index
    %0 = vector.load %arg1[%c0, %c0_0] : memref<8x1024xbf16, #tpu.memory_space<vmem>>, vector<8x1024xbf16>
    %c0_1 = arith.constant 0 : index
    %c0_2 = arith.constant 0 : index
    %1 = vector.load %arg2[%c0_1, %c0_2] : memref<1024x512xbf16, #tpu.memory_space<vmem>>, vector<1024x512xbf16>
    %cst = arith.constant dense<0.000000e+00> : vector<8x512xf32>
    %2 = tpu.matmul %0, %1, %cst {dimension_numbers = #tpu.dot_dimension_numbers<[1], [0], [0], [1], [0, 0, 1, 1], [], []>} : vector<8x1024xbf16>, vector<1024x512xbf16>, vector<8x512xf32> -> vector<8x512xf32>
    %c0_3 = arith.constant 0 : index
    %c0_4 = arith.constant 0 : index
    %3 = vector.load %arg3[%c0_3, %c0_4] : memref<1x512xf32, #tpu.memory_space<vmem>>, vector<1x512xf32>
    %4 = vector.broadcast %3 : vector<1x512xf32> to vector<8x512xf32>
    %5 = arith.addf %2, %4 : vector<8x512xf32>
    %cst_5 = arith.constant 0.000000e+00 : f32
    %6 = vector.broadcast %cst_5 : f32 to vector<8x512xf32>
    %7 = arith.maximumf %5, %6 : vector<8x512xf32>
    %c0_6 = arith.constant 0 : index
    %c0_7 = arith.constant 0 : index
    %8 = vector.load %arg4[%c0_6, %c0_7] : memref<1x512xf32, #tpu.memory_space<vmem>>, vector<1x512xf32>
    %9 = vector.broadcast %8 : vector<1x512xf32> to vector<8x512xf32>
    %10 = arith.mulf %7, %9 : vector<8x512xf32>
    %cst_8 = arith.constant dense<0.000000e+00> : vector<8xf32>
    %11 = vector.multi_reduction <add>, %10, %cst_8 [1] : vector<8x512xf32> to vector<8xf32>
    %12 = vector.shape_cast %11 : vector<8xf32> to vector<8x1xf32>
    %c0_9 = arith.constant 0 : index
    %c0_10 = arith.constant 0 : index
    %13 = vector.load %arg5[%c0_9, %c0_10] : memref<1x1xf32, #tpu.memory_space<vmem>>, vector<1x1xf32>
    %14 = vector.broadcast %13 : vector<1x1xf32> to vector<8x1xf32>
    %15 = arith.addf %12, %14 : vector<8x1xf32>
    %16 = arith.negf %15 : vector<8x1xf32>
    %17 = math.exp %16 : vector<8x1xf32>
    %cst_11 = arith.constant 1.000000e+00 : f32
    %18 = vector.broadcast %cst_11 : f32 to vector<8x1xf32>
    %19 = arith.addf %18, %17 : vector<8x1xf32>
    %20 = arith.divf %18, %19 : vector<8x1xf32>
    %c0_12 = arith.constant 0 : index
    %c0_13 = arith.constant 0 : index
    %21 = vector.load %arg6[%c0_12, %c0_13] : memref<8x1xf32, #tpu.memory_space<vmem>>, vector<8x1xf32>
    tpu.vector_store %arg6[%c0_12, %c0_13], %20 {strides = array<i32>} : memref<8x1xf32, #tpu.memory_space<vmem>>, vector<8x1xf32>,
    return
  }
  func.func @transform_0(%arg0: i32) -> (i32, i32) {
    %c0_i32 = arith.constant 0 : i32
    %c0_i32_0 = arith.constant 0 : i32
    return %arg0, %c0_i32 : i32, i32
  }
  func.func @transform_1(%arg0: i32) -> (i32, i32) {
    %c0_i32 = arith.constant 0 : i32
    %c0_i32_0 = arith.constant 0 : i32
    %c0_i32_1 = arith.constant 0 : i32
    return %c0_i32, %c0_i32_0 : i32, i32
  }
  func.func @transform_2(%arg0: i32) -> (i32, i32) {
    %c0_i32 = arith.constant 0 : i32
    %c0_i32_0 = arith.constant 0 : i32
    %c0_i32_1 = arith.constant 0 : i32
    return %c0_i32, %c0_i32_0 : i32, i32
  }
  func.func @transform_3(%arg0: i32) -> (i32, i32) {
    %c0_i32 = arith.constant 0 : i32
    %c0_i32_0 = arith.constant 0 : i32
    %c0_i32_1 = arith.constant 0 : i32
    return %c0_i32, %c0_i32_0 : i32, i32
  }
  func.func @transform_4(%arg0: i32) -> (i32, i32) {
    %c0_i32 = arith.constant 0 : i32
    %c0_i32_0 = arith.constant 0 : i32
    %c0_i32_1 = arith.constant 0 : i32
    return %c0_i32, %c0_i32_0 : i32, i32
  }
  func.func @transform_5(%arg0: i32) -> (i32, i32) {
    %c0_i32 = arith.constant 0 : i32
    %c0_i32_0 = arith.constant 0 : i32
    return %arg0, %c0_i32 : i32, i32
  }
}

</mosaic_0001>

<llo_original>
// kernel: tpu_custom_call.1
$region0: #{tpu_custom_call.1}
  #allocation0 [shape = 'u32[]', space=smem, size = 0x4, offset = 0x4, fixed_abs, tag = 'smem constant byte address 0x4 - core index']
  #allocation1 [shape = 'u32[144,128]{1,0:T(1,128)}', space=vmem, size = 0x12000, scoped, tag = 'internal scratch']
  #allocation2 [shape = 'f32[1,1]{1,0:T(1,128)S(1)}', space=vmem, size = 0x200, scoped, tag = 'scoped memory for tpu_custom_call.1']
  %s0 = inlined_call_operand.hbm [shape: bf16[8,1024], index: 0, kind: input, shape index: {}]
  %s1 = inlined_call_operand.hbm [shape: bf16[1024,512], index: 1, kind: input, shape index: {}]
  %s2 = inlined_call_operand.vmem [shape: f32[1,512], index: 2, kind: input, shape index: {}]
  %s3 = inlined_call_operand.vmem [shape: f32[1,512], index: 3, kind: input, shape index: {}]
  %s4 = inlined_call_operand.<no memory space> [shape: f32[1,1], index: 4, kind: input, shape index: {}]
  %s5 = inlined_call_operand.vmem [shape: f32[8,1], index: 5, kind: output, shape index: {}]
  %s6 = sld [smem:[#allocation0]]
  $region38: #{tpu_custom_call.1} parent=0
    _
  %s8 = ssub.s32 1, %s6
  %s9 = scalar_select 0, %s8, %s6
  %v10 = vstv %s4
  %11 = vst [vmem:[#allocation2] sm:$0x1] %v10
  $region1: #{tpu_custom_call.1} parent=0
    #allocation3 [shape = 'u8[16384]{0}', space=vmem, size = 0x4000, scoped, tag = 'input window, operand 0, single buffered']
    #allocation4 [shape = 's32[1]{0}', space=sflag, size = 0x4, scoped, tag = 'scoped memory for tpu_custom_call.1']
    #allocation5 [shape = 'u8[1048576]{0}', space=vmem, size = 0x100000, scoped, tag = 'input window, operand 1, single buffered']
    #allocation6 [shape = 's32[1]{0}', space=sflag, size = 0x4, scoped, tag = 'scoped memory for tpu_custom_call.1']
    %12 = vsyncpa [#allocation4], 0
    %13 = vsyncpa [#allocation6], 0
    // Predicated region
    $region2: #{tpu_custom_call.1} parent=1 // pred_check
      _
    $region3: #{tpu_custom_call.1} parent=1 // pred_check_branch
      %15 = sbr.rel (0) target = $region5
    $region4: #{tpu_custom_call.1} parent=1 // pred_region
      %s17 = ssub.s32 512, 512
      %18 = vsyncadd [#allocation4], %s17
      %s20 = sshll.u32 [#allocation3], 4
      %s21 = int_to_ptr.vmem [resolvable:$true] %s20
      %23 = dma.hbm_to_vmem [thread:$0]  %s0, 512, %s21, [#allocation4]
    $region5: #{tpu_custom_call.1} parent=1 // pred_fallthru
      _
    // Predicated region
    $region6: #{tpu_custom_call.1} parent=1 // pred_check
      _
    $region7: #{tpu_custom_call.1} parent=1 // pred_check_branch
      %25 = sbr.rel (0) target = $region9
    $region8: #{tpu_custom_call.1} parent=1 // pred_region
      %s27 = ssub.s32 32768, 32768
      %28 = vsyncadd [#allocation6], %s27
      %s29 = sshll.u32 [#allocation5], 4
      %s30 = int_to_ptr.vmem [resolvable:$true] %s29
      %35 = dma.hbm_to_vmem [thread:$0]  %s1, 32768, %s30, [#allocation6], 256, 256, 16
    $region9: #{tpu_custom_call.1} parent=1 // pred_fallthru
      _
    // Predicated region
    $region10: #{tpu_custom_call.1} parent=1 // pred_check
      _
    $region11: #{tpu_custom_call.1} parent=1 // pred_check_branch
      %37 = sbr.rel (0) target = $region13
    $region12: #{tpu_custom_call.1} parent=1 // pred_region
      _
    $region13: #{tpu_custom_call.1} parent=1 // pred_fallthru
      _
    // Predicated region
    $region14: #{tpu_custom_call.1} parent=1 // pred_check
      _
    $region15: #{tpu_custom_call.1} parent=1 // pred_check_branch
      %39 = sbr.rel (0) target = $region17
    $region16: #{tpu_custom_call.1} parent=1 // pred_region
      _
    $region17: #{tpu_custom_call.1} parent=1 // pred_fallthru
      _
    // Predicated region
    $region18: #{tpu_custom_call.1} parent=1 // pred_check
      _
    $region19: #{tpu_custom_call.1} parent=1 // pred_check_branch
      %41 = sbr.rel (0) target = $region21
    $region20: #{tpu_custom_call.1} parent=1 // pred_region
      _
    $region21: #{tpu_custom_call.1} parent=1 // pred_fallthru
      _
    // Predicated region
    $region22: #{tpu_custom_call.1} parent=1 // pred_check
      _
    $region23: #{tpu_custom_call.1} parent=1 // pred_check_branch
      %43 = sbr.rel (0) target = $region25
    $region24: #{tpu_custom_call.1} parent=1 // pred_region
      %44 = dma.done [#allocation4], 512
    $region25: #{tpu_custom_call.1} parent=1 // pred_fallthru
      _
    // Predicated region
    $region26: #{tpu_custom_call.1} parent=1 // pred_check
      _
    $region27: #{tpu_custom_call.1} parent=1 // pred_check_branch
      %46 = sbr.rel (0) target = $region29
    $region28: #{tpu_custom_call.1} parent=1 // pred_region
      %47 = dma.done [#allocation6], 32768
    $region29: #{tpu_custom_call.1} parent=1 // pred_fallthru
      _
    %v48 = vld [vmem:[#allocation3] sm:$0xff]
    %v49 = vld [vmem:[#allocation3 + $0x8] sm:$0xff]
    %v50 = vld [vmem:[#allocation3 + $0x10] sm:$0xff]
    %v51 = vld [vmem:[#allocation3 + $0x18] sm:$0xff]
    %v52 = vld [vmem:[#allocation5] sm:$0xff]
    %v53 = vld [vmem:[#allocation5 + $0x8] sm:$0xff]
    %v54 = vld [vmem:[#allocation5 + $0x10] sm:$0xff]
    %v55 = vld [vmem:[#allocation5 + $0x18] sm:$0xff]
    %v56 = vld [vmem:[#allocation5 + $0x20] sm:$0xff]
    %v57 = vld [vmem:[#allocation5 + $0x28] sm:$0xff]
    %v58 = vld [vmem:[#allocation5 + $0x30] sm:$0xff]
    %v59 = vld [vmem:[#allocation5 + $0x38] sm:$0xff]
    %v60 = vld [vmem:[#allocation5 + $0x40] sm:$0xff]
    %v61 = vld [vmem:[#allocation5 + $0x48] sm:$0xff]
    %v62 = vld [vmem:[#allocation5 + $0x50] sm:$0xff]
    %v63 = vld [vmem:[#allocation5 + $0x58] sm:$0xff]
    %v64 = vld [vmem:[#allocation5 + $0x60] sm:$0xff]
    %v65 = vld [vmem:[#allocation5 + $0x68] sm:$0xff]
    %v66 = vld [vmem:[#allocation5 + $0x70] sm:$0xff]
    %v67 = vld [vmem:[#allocation5 + $0x78] sm:$0xff]
    %v68 = vld [vmem:[#allocation5 + $0x80] sm:$0xff]
    %v69 = vld [vmem:[#allocation5 + $0x88] sm:$0xff]
    %v70 = vld [vmem:[#allocation5 + $0x90] sm:$0xff]
    %v71 = vld [vmem:[#allocation5 + $0x98] sm:$0xff]
    %v72 = vld [vmem:[#allocation5 + $0xa0] sm:$0xff]
    %v73 = vld [vmem:[#allocation5 + $0xa8] sm:$0xff]
    %v74 = vld [vmem:[#allocation5 + $0xb0] sm:$0xff]
    %v75 = vld [vmem:[#allocation5 + $0xb8] sm:$0xff]
    %v76 = vld [vmem:[#allocation5 + $0xc0] sm:$0xff]
    %v77 = vld [vmem:[#allocation5 + $0xc8] sm:$0xff]
    %v78 = vld [vmem:[#allocation5 + $0xd0] sm:$0xff]
    %v79 = vld [vmem:[#allocation5 + $0xd8] sm:$0xff]
    %v80 = vld [vmem:[#allocation5 + $0xe0] sm:$0xff]
    %v81 = vld [vmem:[#allocation5 + $0xe8] sm:$0xff]
    %v82 = vld [vmem:[#allocation5 + $0xf0] sm:$0xff]
    %v83 = vld [vmem:[#allocation5 + $0xf8] sm:$0xff]
    %v84 = vld [vmem:[#allocation5 + $0x100] sm:$0xff]
    %v85 = vld [vmem:[#allocation5 + $0x108] sm:$0xff]
    %v86 = vld [vmem:[#allocation5 + $0x110] sm:$0xff]
    %v87 = vld [vmem:[#allocation5 + $0x118] sm:$0xff]
    %v88 = vld [vmem:[#allocation5 + $0x120] sm:$0xff]
    %v89 = vld [vmem:[#allocation5 + $0x128] sm:$0xff]
    %v90 = vld [vmem:[#allocation5 + $0x130] sm:$0xff]
    %v91 = vld [vmem:[#allocation5 + $0x138] sm:$0xff]
    %v92 = vld [vmem:[#allocation5 + $0x140] sm:$0xff]
    %v93 = vld [vmem:[#allocation5 + $0x148] sm:$0xff]
    %v94 = vld [vmem:[#allocation5 + $0x150] sm:$0xff]
    %v95 = vld [vmem:[#allocation5 + $0x158] sm:$0xff]
    %v96 = vld [vmem:[#allocation5 + $0x160] sm:$0xff]
    %v97 = vld [vmem:[#allocation5 + $0x168] sm:$0xff]
    %v98 = vld [vmem:[#allocation5 + $0x170] sm:$0xff]
    %v99 = vld [vmem:[#allocation5 + $0x178] sm:$0xff]
    %v100 = vld [vmem:[#allocation5 + $0x180] sm:$0xff]
    %v101 = vld [vmem:[#allocation5 + $0x188] sm:$0xff]
    %v102 = vld [vmem:[#allocation5 + $0x190] sm:$0xff]
    %v103 = vld [vmem:[#allocation5 + $0x198] sm:$0xff]
    %v104 = vld [vmem:[#allocation5 + $0x1a0] sm:$0xff]
    %v105 = vld [vmem:[#allocation5 + $0x1a8] sm:$0xff]
    %v106 = vld [vmem:[#allocation5 + $0x1b0] sm:$0xff]
    %v107 = vld [vmem:[#allocation5 + $0x1b8] sm:$0xff]
    %v108 = vld [vmem:[#allocation5 + $0x1c0] sm:$0xff]
    %v109 = vld [vmem:[#allocation5 + $0x1c8] sm:$0xff]
    %v110 = vld [vmem:[#allocation5 + $0x1d0] sm:$0xff]
    %v111 = vld [vmem:[#allocation5 + $0x1d8] sm:$0xff]
    %v112 = vld [vmem:[#allocation5 + $0x1e0] sm:$0xff]
    %v113 = vld [vmem:[#allocation5 + $0x1e8] sm:$0xff]
    %v114 = vld [vmem:[#allocation5 + $0x1f0] sm:$0xff]
    %v115 = vld [vmem:[#allocation5 + $0x1f8] sm:$0xff]
    %v116 = vld [vmem:[#allocation5 + $0x200] sm:$0xff]
    %v117 = vld [vmem:[#allocation5 + $0x208] sm:$0xff]
    %v118 = vld [vmem:[#allocation5 + $0x210] sm:$0xff]
    %v119 = vld [vmem:[#allocation5 + $0x218] sm:$0xff]
    %v120 = vld [vmem:[#allocation5 + $0x220] sm:$0xff]
    %v121 = vld [vmem:[#allocation5 + $0x228] sm:$0xff]
    %v122 = vld [vmem:[#allocation5 + $0x230] sm:$0xff]
    %v123 = vld [vmem:[#allocation5 + $0x238] sm:$0xff]
    %v124 = vld [vmem:[#allocation5 + $0x240] sm:$0xff]
    %v125 = vld [vmem:[#allocation5 + $0x248] sm:$0xff]
    %v126 = vld [vmem:[#allocation5 + $0x250] sm:$0xff]
    %v127 = vld [vmem:[#allocation5 + $0x258] sm:$0xff]
    %v128 = vld [vmem:[#allocation5 + $0x260] sm:$0xff]
    %v129 = vld [vmem:[#allocation5 + $0x268] sm:$0xff]
    %v130 = vld [vmem:[#allocation5 + $0x270] sm:$0xff]
    %v131 = vld [vmem:[#allocation5 + $0x278] sm:$0xff]
    %v132 = vld [vmem:[#allocation5 + $0x280] sm:$0xff]
    %v133 = vld [vmem:[#allocation5 + $0x288] sm:$0xff]
    %v134 = vld [vmem:[#allocation5 + $0x290] sm:$0xff]
    %v135 = vld [vmem:[#allocation5 + $0x298] sm:$0xff]
    %v136 = vld [vmem:[#allocation5 + $0x2a0] sm:$0xff]
    %v137 = vld [vmem:[#allocation5 + $0x2a8] sm:$0xff]
    %v138 = vld [vmem:[#allocation5 + $0x2b0] sm:$0xff]
    %v139 = vld [vmem:[#allocation5 + $0x2b8] sm:$0xff]
    %v140 = vld [vmem:[#allocation5 + $0x2c0] sm:$0xff]
    %v141 = vld [vmem:[#allocation5 + $0x2c8] sm:$0xff]
    %v142 = vld [vmem:[#allocation5 + $0x2d0] sm:$0xff]
    %v143 = vld [vmem:[#allocation5 + $0x2d8] sm:$0xff]
    %v144 = vld [vmem:[#allocation5 + $0x2e0] sm:$0xff]
    %v145 = vld [vmem:[#allocation5 + $0x2e8] sm:$0xff]
    %v146 = vld [vmem:[#allocation5 + $0x2f0] sm:$0xff]
    %v147 = vld [vmem:[#allocation5 + $0x2f8] sm:$0xff]
    %v148 = vld [vmem:[#allocation5 + $0x300] sm:$0xff]
    %v149 = vld [vmem:[#allocation5 + $0x308] sm:$0xff]
    %v150 = vld [vmem:[#allocation5 + $0x310] sm:$0xff]
    %v151 = vld [vmem:[#allocation5 + $0x318] sm:$0xff]
    %v152 = vld [vmem:[#allocation5 + $0x320] sm:$0xff]
    %v153 = vld [vmem:[#allocation5 + $0x328] sm:$0xff]
    %v154 = vld [vmem:[#allocation5 + $0x330] sm:$0xff]
    %v155 = vld [vmem:[#allocation5 + $0x338] sm:$0xff]
    %v156 = vld [vmem:[#allocation5 + $0x340] sm:$0xff]
    %v157 = vld [vmem:[#allocation5 + $0x348] sm:$0xff]
    %v158 = vld [vmem:[#allocation5 + $0x350] sm:$0xff]
    %v159 = vld [vmem:[#allocation5 + $0x358] sm:$0xff]
    %v160 = vld [vmem:[#allocation5 + $0x360] sm:$0xff]
    %v161 = vld [vmem:[#allocation5 + $0x368] sm:$0xff]
    %v162 = vld [vmem:[#allocation5 + $0x370] sm:$0xff]
    %v163 = vld [vmem:[#allocation5 + $0x378] sm:$0xff]
    %v164 = vld [vmem:[#allocation5 + $0x380] sm:$0xff]
    %v165 = vld [vmem:[#allocation5 + $0x388] sm:$0xff]
    %v166 = vld [vmem:[#allocation5 + $0x390] sm:$0xff]
    %v167 = vld [vmem:[#allocation5 + $0x398] sm:$0xff]
    %v168 = vld [vmem:[#allocation5 + $0x3a0] sm:$0xff]
    %v169 = vld [vmem:[#allocation5 + $0x3a8] sm:$0xff]
    %v170 = vld [vmem:[#allocation5 + $0x3b0] sm:$0xff]
    %v171 = vld [vmem:[#allocation5 + $0x3b8] sm:$0xff]
    %v172 = vld [vmem:[#allocation5 + $0x3c0] sm:$0xff]
    %v173 = vld [vmem:[#allocation5 + $0x3c8] sm:$0xff]
    %v174 = vld [vmem:[#allocation5 + $0x3d0] sm:$0xff]
    %v175 = vld [vmem:[#allocation5 + $0x3d8] sm:$0xff]
    %v176 = vld [vmem:[#allocation5 + $0x3e0] sm:$0xff]
    %v177 = vld [vmem:[#allocation5 + $0x3e8] sm:$0xff]
    %v178 = vld [vmem:[#allocation5 + $0x3f0] sm:$0xff]
    %v179 = vld [vmem:[#allocation5 + $0x3f8] sm:$0xff]
    %v180 = vld [vmem:[#allocation5 + $0x400] sm:$0xff]
    %v181 = vld [vmem:[#allocation5 + $0x408] sm:$0xff]
    %v182 = vld [vmem:[#allocation5 + $0x410] sm:$0xff]
    %v183 = vld [vmem:[#allocation5 + $0x418] sm:$0xff]
    %v184 = vld [vmem:[#allocation5 + $0x420] sm:$0xff]
    %v185 = vld [vmem:[#allocation5 + $0x428] sm:$0xff]
    %v186 = vld [vmem:[#allocation5 + $0x430] sm:$0xff]
    %v187 = vld [vmem:[#allocation5 + $0x438] sm:$0xff]
    %v188 = vld [vmem:[#allocation5 + $0x440] sm:$0xff]
    %v189 = vld [vmem:[#allocation5 + $0x448] sm:$0xff]
    %v190 = vld [vmem:[#allocation5 + $0x450] sm:$0xff]
    %v191 = vld [vmem:[#allocation5 + $0x458] sm:$0xff]
    %v192 = vld [vmem:[#allocation5 + $0x460] sm:$0xff]
    %v193 = vld [vmem:[#allocation5 + $0x468] sm:$0xff]
    %v194 = vld [vmem:[#allocation5 + $0x470] sm:$0xff]
    %v195 = vld [vmem:[#allocation5 + $0x478] sm:$0xff]
    %v196 = vld [vmem:[#allocation5 + $0x480] sm:$0xff]
    %v197 = vld [vmem:[#allocation5 + $0x488] sm:$0xff]
    %v198 = vld [vmem:[#allocation5 + $0x490] sm:$0xff]
    %v199 = vld [vmem:[#allocation5 + $0x498] sm:$0xff]
    %v200 = vld [vmem:[#allocation5 + $0x4a0] sm:$0xff]
    %v201 = vld [vmem:[#allocation5 + $0x4a8] sm:$0xff]
    %v202 = vld [vmem:[#allocation5 + $0x4b0] sm:$0xff]
    %v203 = vld [vmem:[#allocation5 + $0x4b8] sm:$0xff]
    %v204 = vld [vmem:[#allocation5 + $0x4c0] sm:$0xff]
    %v205 = vld [vmem:[#allocation5 + $0x4c8] sm:$0xff]
    %v206 = vld [vmem:[#allocation5 + $0x4d0] sm:$0xff]
    %v207 = vld [vmem:[#allocation5 + $0x4d8] sm:$0xff]
    %v208 = vld [vmem:[#allocation5 + $0x4e0] sm:$0xff]
    %v209 = vld [vmem:[#allocation5 + $0x4e8] sm:$0xff]
    %v210 = vld [vmem:[#allocation5 + $0x4f0] sm:$0xff]
    %v211 = vld [vmem:[#allocation5 + $0x4f8] sm:$0xff]
    %v212 = vld [vmem:[#allocation5 + $0x500] sm:$0xff]
    %v213 = vld [vmem:[#allocation5 + $0x508] sm:$0xff]
    %v214 = vld [vmem:[#allocation5 + $0x510] sm:$0xff]
    %v215 = vld [vmem:[#allocation5 + $0x518] sm:$0xff]
    %v216 = vld [vmem:[#allocation5 + $0x520] sm:$0xff]
    %v217 = vld [vmem:[#allocation5 + $0x528] sm:$0xff]
    %v218 = vld [vmem:[#allocation5 + $0x530] sm:$0xff]
    %v219 = vld [vmem:[#allocation5 + $0x538] sm:$0xff]
    %v220 = vld [vmem:[#allocation5 + $0x540] sm:$0xff]
    %v221 = vld [vmem:[#allocation5 + $0x548] sm:$0xff]
    %v222 = vld [vmem:[#allocation5 + $0x550] sm:$0xff]
    %v223 = vld [vmem:[#allocation5 + $0x558] sm:$0xff]
    %v224 = vld [vmem:[#allocation5 + $0x560] sm:$0xff]
    %v225 = vld [vmem:[#allocation5 + $0x568] sm:$0xff]
    %v226 = vld [vmem:[#allocation5 + $0x570] sm:$0xff]
    %v227 = vld [vmem:[#allocation5 + $0x578] sm:$0xff]
    %v228 = vld [vmem:[#allocation5 + $0x580] sm:$0xff]
    %v229 = vld [vmem:[#allocation5 + $0x588] sm:$0xff]
    %v230 = vld [vmem:[#allocation5 + $0x590] sm:$0xff]
    %v231 = vld [vmem:[#allocation5 + $0x598] sm:$0xff]
    %v232 = vld [vmem:[#allocation5 + $0x5a0] sm:$0xff]
    %v233 = vld [vmem:[#allocation5 + $0x5a8] sm:$0xff]
    %v234 = vld [vmem:[#allocation5 + $0x5b0] sm:$0xff]
    %v235 = vld [vmem:[#allocation5 + $0x5b8] sm:$0xff]
    %v236 = vld [vmem:[#allocation5 + $0x5c0] sm:$0xff]
    %v237 = vld [vmem:[#allocation5 + $0x5c8] sm:$0xff]
    %v238 = vld [vmem:[#allocation5 + $0x5d0] sm:$0xff]
    %v239 = vld [vmem:[#allocation5 + $0x5d8] sm:$0xff]
    %v240 = vld [vmem:[#allocation5 + $0x5e0] sm:$0xff]
    %v241 = vld [vmem:[#allocation5 + $0x5e8] sm:$0xff]
    %v242 = vld [vmem:[#allocation5 + $0x5f0] sm:$0xff]
    %v243 = vld [vmem:[#allocation5 + $0x5f8] sm:$0xff]
    %v244 = vld [vmem:[#allocation5 + $0x600] sm:$0xff]
    %v245 = vld [vmem:[#allocation5 + $0x608] sm:$0xff]
    %v246 = vld [vmem:[#allocation5 + $0x610] sm:$0xff]
    %v247 = vld [vmem:[#allocation5 + $0x618] sm:$0xff]
    %v248 = vld [vmem:[#allocation5 + $0x620] sm:$0xff]
    %v249 = vld [vmem:[#allocation5 + $0x628] sm:$0xff]
    %v250 = vld [vmem:[#allocation5 + $0x630] sm:$0xff]
    %v251 = vld [vmem:[#allocation5 + $0x638] sm:$0xff]
    %v252 = vld [vmem:[#allocation5 + $0x640] sm:$0xff]
    %v253 = vld [vmem:[#allocation5 + $0x648] sm:$0xff]
    %v254 = vld [vmem:[#allocation5 + $0x650] sm:$0xff]
    %v255 = vld [vmem:[#allocation5 + $0x658] sm:$0xff]
    %v256 = vld [vmem:[#allocation5 + $0x660] sm:$0xff]
    %v257 = vld [vmem:[#allocation5 + $0x668] sm:$0xff]
    %v258 = vld [vmem:[#allocation5 + $0x670] sm:$0xff]
    %v259 = vld [vmem:[#allocation5 + $0x678] sm:$0xff]
    %v260 = vld [vmem:[#allocation5 + $0x680] sm:$0xff]
    %v261 = vld [vmem:[#allocation5 + $0x688] sm:$0xff]
    %v262 = vld [vmem:[#allocation5 + $0x690] sm:$0xff]
    %v263 = vld [vmem:[#allocation5 + $0x698] sm:$0xff]
    %v264 = vld [vmem:[#allocation5 + $0x6a0] sm:$0xff]
    %v265 = vld [vmem:[#allocation5 + $0x6a8] sm:$0xff]
    %v266 = vld [vmem:[#allocation5 + $0x6b0] sm:$0xff]
    %v267 = vld [vmem:[#allocation5 + $0x6b8] sm:$0xff]
    %v268 = vld [vmem:[#allocation5 + $0x6c0] sm:$0xff]
    %v269 = vld [vmem:[#allocation5 + $0x6c8] sm:$0xff]
    %v270 = vld [vmem:[#allocation5 + $0x6d0] sm:$0xff]
    %v271 = vld [vmem:[#allocation5 + $0x6d8] sm:$0xff]
    %v272 = vld [vmem:[#allocation5 + $0x6e0] sm:$0xff]
    %v273 = vld [vmem:[#allocation5 + $0x6e8] sm:$0xff]
    %v274 = vld [vmem:[#allocation5 + $0x6f0] sm:$0xff]
    %v275 = vld [vmem:[#allocation5 + $0x6f8] sm:$0xff]
    %v276 = vld [vmem:[#allocation5 + $0x700] sm:$0xff]
    %v277 = vld [vmem:[#allocation5 + $0x708] sm:$0xff]
    %v278 = vld [vmem:[#allocation5 + $0x710] sm:$0xff]
    %v279 = vld [vmem:[#allocation5 + $0x718] sm:$0xff]
    %v280 = vld [vmem:[#allocation5 + $0x720] sm:$0xff]
    %v281 = vld [vmem:[#allocation5 + $0x728] sm:$0xff]
    %v282 = vld [vmem:[#allocation5 + $0x730] sm:$0xff]
    %v283 = vld [vmem:[#allocation5 + $0x738] sm:$0xff]
    %v284 = vld [vmem:[#allocation5 + $0x740] sm:$0xff]
    %v285 = vld [vmem:[#allocation5 + $0x748] sm:$0xff]
    %v286 = vld [vmem:[#allocation5 + $0x750] sm:$0xff]
    %v287 = vld [vmem:[#allocation5 + $0x758] sm:$0xff]
    %v288 = vld [vmem:[#allocation5 + $0x760] sm:$0xff]
    %v289 = vld [vmem:[#allocation5 + $0x768] sm:$0xff]
    %v290 = vld [vmem:[#allocation5 + $0x770] sm:$0xff]
    %v291 = vld [vmem:[#allocation5 + $0x778] sm:$0xff]
    %v292 = vld [vmem:[#allocation5 + $0x780] sm:$0xff]
    %v293 = vld [vmem:[#allocation5 + $0x788] sm:$0xff]
    %v294 = vld [vmem:[#allocation5 + $0x790] sm:$0xff]
    %v295 = vld [vmem:[#allocation5 + $0x798] sm:$0xff]
    %v296 = vld [vmem:[#allocation5 + $0x7a0] sm:$0xff]
    %v297 = vld [vmem:[#allocation5 + $0x7a8] sm:$0xff]
    %v298 = vld [vmem:[#allocation5 + $0x7b0] sm:$0xff]
    %v299 = vld [vmem:[#allocation5 + $0x7b8] sm:$0xff]
    %v300 = vld [vmem:[#allocation5 + $0x7c0] sm:$0xff]
    %v301 = vld [vmem:[#allocation5 + $0x7c8] sm:$0xff]
    %v302 = vld [vmem:[#allocation5 + $0x7d0] sm:$0xff]
    %v303 = vld [vmem:[#allocation5 + $0x7d8] sm:$0xff]
    %v304 = vld [vmem:[#allocation5 + $0x7e0] sm:$0xff]
    %v305 = vld [vmem:[#allocation5 + $0x7e8] sm:$0xff]
    %v306 = vld [vmem:[#allocation5 + $0x7f0] sm:$0xff]
    %v307 = vld [vmem:[#allocation5 + $0x7f8] sm:$0xff]
    %v308 = vld [vmem:[%s2] sm:$0xf]
    %v310 = vlaneseq
    %v311 = vshrl.u32 %v310, 7
    %v312 = vsub.s32 0, %v311
    %v313 = vrot.slane %v308, %v312
    %v314 = vlaneseq
    %v315 = vshrl.u32 %v314, 7
    %v316 = vsub.s32 1, %v315
    %v317 = vrot.slane %v308, %v316
    %v318 = vlaneseq
    %v319 = vshrl.u32 %v318, 7
    %v320 = vsub.s32 2, %v319
    %v321 = vrot.slane %v308, %v320
    %v322 = vlaneseq
    %v323 = vshrl.u32 %v322, 7
    %v324 = vsub.s32 3, %v323
    %v325 = vrot.slane %v308, %v324
    %v334 = vunpack.c.l.b16 %v48
    %v335 = vunpack.c.h.b16 %v48
    %v336 = vunpack.c.l.b16 %v49
    %v337 = vunpack.c.h.b16 %v49
    %v338 = vunpack.c.l.b16 %v50
    %v339 = vunpack.c.h.b16 %v50
    %v340 = vunpack.c.l.b16 %v51
    %v341 = vunpack.c.h.b16 %v51
    %v342 = vpack.c.b16 %v334, %v334
    %v343 = vpack.c.b16 %v335, %v335
    %v344 = vpack.c.b16 %v336, %v336
    %v345 = vpack.c.b16 %v337, %v337
    %v346 = vpack.c.b16 %v338, %v338
    %v347 = vpack.c.b16 %v339, %v339
    %v348 = vpack.c.b16 %v340, %v340
    %v349 = vpack.c.b16 %v341, %v341
    %v614 = vunpack.c.l.b16 %v52
    %v615 = vunpack.c.h.b16 %v52
    %v616 = vunpack.c.l.b16 %v53
    %v617 = vunpack.c.h.b16 %v53
    %v618 = vunpack.c.l.b16 %v54
    %v619 = vunpack.c.h.b16 %v54
    %v620 = vunpack.c.l.b16 %v55
    %v621 = vunpack.c.h.b16 %v55
    %v622 = vunpack.c.l.b16 %v56
    %v623 = vunpack.c.h.b16 %v56
    %v624 = vunpack.c.l.b16 %v57
    %v625 = vunpack.c.h.b16 %v57
    %v626 = vunpack.c.l.b16 %v58
    %v627 = vunpack.c.h.b16 %v58
    %v628 = vunpack.c.l.b16 %v59
    %v629 = vunpack.c.h.b16 %v59
    %v630 = vunpack.c.l.b16 %v60
    %v631 = vunpack.c.h.b16 %v60
    %v632 = vunpack.c.l.b16 %v61
    %v633 = vunpack.c.h.b16 %v61
    %v634 = vunpack.c.l.b16 %v62
    %v635 = vunpack.c.h.b16 %v62
    %v636 = vunpack.c.l.b16 %v63
    %v637 = vunpack.c.h.b16 %v63
    %v638 = vunpack.c.l.b16 %v64
    %v639 = vunpack.c.h.b16 %v64
    %v640 = vunpack.c.l.b16 %v65
    %v641 = vunpack.c.h.b16 %v65
    %v642 = vunpack.c.l.b16 %v66
    %v643 = vunpack.c.h.b16 %v66
    %v644 = vunpack.c.l.b16 %v67
    %v645 = vunpack.c.h.b16 %v67
    %v646 = vunpack.c.l.b16 %v68
    %v647 = vunpack.c.h.b16 %v68
    %v648 = vunpack.c.l.b16 %v69
    %v649 = vunpack.c.h.b16 %v69
    %v650 = vunpack.c.l.b16 %v70
    %v651 = vunpack.c.h.b16 %v70
    %v652 = vunpack.c.l.b16 %v71
    %v653 = vunpack.c.h.b16 %v71
    %v654 = vunpack.c.l.b16 %v72
    %v655 = vunpack.c.h.b16 %v72
    %v656 = vunpack.c.l.b16 %v73
    %v657 = vunpack.c.h.b16 %v73
    %v658 = vunpack.c.l.b16 %v74
    %v659 = vunpack.c.h.b16 %v74
    %v660 = vunpack.c.l.b16 %v75
    %v661 = vunpack.c.h.b16 %v75
    %v662 = vunpack.c.l.b16 %v76
    %v663 = vunpack.c.h.b16 %v76
    %v664 = vunpack.c.l.b16 %v77
    %v665 = vunpack.c.h.b16 %v77
    %v666 = vunpack.c.l.b16 %v78
    %v667 = vunpack.c.h.b16 %v78
    %v668 = vunpack.c.l.b16 %v79
    %v669 = vunpack.c.h.b16 %v79
    %v670 = vunpack.c.l.b16 %v80
    %v671 = vunpack.c.h.b16 %v80
    %v672 = vunpack.c.l.b16 %v81
    %v673 = vunpack.c.h.b16 %v81
    %v674 = vunpack.c.l.b16 %v82
    %v675 = vunpack.c.h.b16 %v82
    %v676 = vunpack.c.l.b16 %v83
    %v677 = vunpack.c.h.b16 %v83
    %v678 = vunpack.c.l.b16 %v84
    %v679 = vunpack.c.h.b16 %v84
    %v680 = vunpack.c.l.b16 %v85
    %v681 = vunpack.c.h.b16 %v85
    %v682 = vunpack.c.l.b16 %v86
    %v683 = vunpack.c.h.b16 %v86
    %v684 = vunpack.c.l.b16 %v87
    %v685 = vunpack.c.h.b16 %v87
    %v686 = vunpack.c.l.b16 %v88
    %v687 = vunpack.c.h.b16 %v88
    %v688 = vunpack.c.l.b16 %v89
    %v689 = vunpack.c.h.b16 %v89
    %v690 = vunpack.c.l.b16 %v90
    %v691 = vunpack.c.h.b16 %v90
    %v692 = vunpack.c.l.b16 %v91
    %v693 = vunpack.c.h.b16 %v91
    %v694 = vunpack.c.l.b16 %v92
    %v695 = vunpack.c.h.b16 %v92
    %v696 = vunpack.c.l.b16 %v93
    %v697 = vunpack.c.h.b16 %v93
    %v698 = vunpack.c.l.b16 %v94
    %v699 = vunpack.c.h.b16 %v94
    %v700 = vunpack.c.l.b16 %v95
    %v701 = vunpack.c.h.b16 %v95
    %v702 = vunpack.c.l.b16 %v96
    %v703 = vunpack.c.h.b16 %v96
    %v704 = vunpack.c.l.b16 %v97
    %v705 = vunpack.c.h.b16 %v97
    %v706 = vunpack.c.l.b16 %v98
    %v707 = vunpack.c.h.b16 %v98
    %v708 = vunpack.c.l.b16 %v99
    %v709 = vunpack.c.h.b16 %v99
    %v710 = vunpack.c.l.b16 %v100
    %v711 = vunpack.c.h.b16 %v100
    %v712 = vunpack.c.l.b16 %v101
    %v713 = vunpack.c.h.b16 %v101
    %v714 = vunpack.c.l.b16 %v102
    %v715 = vunpack.c.h.b16 %v102
    %v716 = vunpack.c.l.b16 %v103
    %v717 = vunpack.c.h.b16 %v103
    %v718 = vunpack.c.l.b16 %v104
    %v719 = vunpack.c.h.b16 %v104
    %v720 = vunpack.c.l.b16 %v105
    %v721 = vunpack.c.h.b16 %v105
    %v722 = vunpack.c.l.b16 %v106
    %v723 = vunpack.c.h.b16 %v106
    %v724 = vunpack.c.l.b16 %v107
    %v725 = vunpack.c.h.b16 %v107
    %v726 = vunpack.c.l.b16 %v108
    %v727 = vunpack.c.h.b16 %v108
    %v728 = vunpack.c.l.b16 %v109
    %v729 = vunpack.c.h.b16 %v109
    %v730 = vunpack.c.l.b16 %v110
    %v731 = vunpack.c.h.b16 %v110
    %v732 = vunpack.c.l.b16 %v111
    %v733 = vunpack.c.h.b16 %v111
    %v734 = vunpack.c.l.b16 %v112
    %v735 = vunpack.c.h.b16 %v112
    %v736 = vunpack.c.l.b16 %v113
    %v737 = vunpack.c.h.b16 %v113
    %v738 = vunpack.c.l.b16 %v114
    %v739 = vunpack.c.h.b16 %v114
    %v740 = vunpack.c.l.b16 %v115
    %v741 = vunpack.c.h.b16 %v115
    %v742 = vunpack.c.l.b16 %v116
    %v743 = vunpack.c.h.b16 %v116
    %v744 = vunpack.c.l.b16 %v117
    %v745 = vunpack.c.h.b16 %v117
    %v746 = vunpack.c.l.b16 %v118
    %v747 = vunpack.c.h.b16 %v118
    %v748 = vunpack.c.l.b16 %v119
    %v749 = vunpack.c.h.b16 %v119
    %v750 = vunpack.c.l.b16 %v120
    %v751 = vunpack.c.h.b16 %v120
    %v752 = vunpack.c.l.b16 %v121
    %v753 = vunpack.c.h.b16 %v121
    %v754 = vunpack.c.l.b16 %v122
    %v755 = vunpack.c.h.b16 %v122
    %v756 = vunpack.c.l.b16 %v123
    %v757 = vunpack.c.h.b16 %v123
    %v758 = vunpack.c.l.b16 %v124
    %v759 = vunpack.c.h.b16 %v124
    %v760 = vunpack.c.l.b16 %v125
    %v761 = vunpack.c.h.b16 %v125
    %v762 = vunpack.c.l.b16 %v126
    %v763 = vunpack.c.h.b16 %v126
    %v764 = vunpack.c.l.b16 %v127
    %v765 = vunpack.c.h.b16 %v127
    %v766 = vunpack.c.l.b16 %v128
    %v767 = vunpack.c.h.b16 %v128
    %v768 = vunpack.c.l.b16 %v129
    %v769 = vunpack.c.h.b16 %v129
    %v770 = vunpack.c.l.b16 %v130
    %v771 = vunpack.c.h.b16 %v130
    %v772 = vunpack.c.l.b16 %v131
    %v773 = vunpack.c.h.b16 %v131
    %v774 = vunpack.c.l.b16 %v132
    %v775 = vunpack.c.h.b16 %v132
    %v776 = vunpack.c.l.b16 %v133
    %v777 = vunpack.c.h.b16 %v133
    %v778 = vunpack.c.l.b16 %v134
    %v779 = vunpack.c.h.b16 %v134
    %v780 = vunpack.c.l.b16 %v135
    %v781 = vunpack.c.h.b16 %v135
    %v782 = vunpack.c.l.b16 %v136
    %v783 = vunpack.c.h.b16 %v136
    %v784 = vunpack.c.l.b16 %v137
    %v785 = vunpack.c.h.b16 %v137
    %v786 = vunpack.c.l.b16 %v138
    %v787 = vunpack.c.h.b16 %v138
    %v788 = vunpack.c.l.b16 %v139
    %v789 = vunpack.c.h.b16 %v139
    %v790 = vunpack.c.l.b16 %v140
    %v791 = vunpack.c.h.b16 %v140
    %v792 = vunpack.c.l.b16 %v141
    %v793 = vunpack.c.h.b16 %v141
    %v794 = vunpack.c.l.b16 %v142
    %v795 = vunpack.c.h.b16 %v142
    %v796 = vunpack.c.l.b16 %v143
    %v797 = vunpack.c.h.b16 %v143
    %v798 = vunpack.c.l.b16 %v144
    %v799 = vunpack.c.h.b16 %v144
    %v800 = vunpack.c.l.b16 %v145
    %v801 = vunpack.c.h.b16 %v145
    %v802 = vunpack.c.l.b16 %v146
    %v803 = vunpack.c.h.b16 %v146
    %v804 = vunpack.c.l.b16 %v147
    %v805 = vunpack.c.h.b16 %v147
    %v806 = vunpack.c.l.b16 %v148
    %v807 = vunpack.c.h.b16 %v148
    %v808 = vunpack.c.l.b16 %v149
    %v809 = vunpack.c.h.b16 %v149
    %v810 = vunpack.c.l.b16 %v150
    %v811 = vunpack.c.h.b16 %v150
    %v812 = vunpack.c.l.b16 %v151
    %v813 = vunpack.c.h.b16 %v151
    %v814 = vunpack.c.l.b16 %v152
    %v815 = vunpack.c.h.b16 %v152
    %v816 = vunpack.c.l.b16 %v153
    %v817 = vunpack.c.h.b16 %v153
    %v818 = vunpack.c.l.b16 %v154
    %v819 = vunpack.c.h.b16 %v154
    %v820 = vunpack.c.l.b16 %v155
    %v821 = vunpack.c.h.b16 %v155
    %v822 = vunpack.c.l.b16 %v156
    %v823 = vunpack.c.h.b16 %v156
    %v824 = vunpack.c.l.b16 %v157
    %v825 = vunpack.c.h.b16 %v157
    %v826 = vunpack.c.l.b16 %v158
    %v827 = vunpack.c.h.b16 %v158
    %v828 = vunpack.c.l.b16 %v159
    %v829 = vunpack.c.h.b16 %v159
    %v830 = vunpack.c.l.b16 %v160
    %v831 = vunpack.c.h.b16 %v160
    %v832 = vunpack.c.l.b16 %v161
    %v833 = vunpack.c.h.b16 %v161
    %v834 = vunpack.c.l.b16 %v162
    %v835 = vunpack.c.h.b16 %v162
    %v836 = vunpack.c.l.b16 %v163
    %v837 = vunpack.c.h.b16 %v163
    %v838 = vunpack.c.l.b16 %v164
    %v839 = vunpack.c.h.b16 %v164
    %v840 = vunpack.c.l.b16 %v165
    %v841 = vunpack.c.h.b16 %v165
    %v842 = vunpack.c.l.b16 %v166
    %v843 = vunpack.c.h.b16 %v166
    %v844 = vunpack.c.l.b16 %v167
    %v845 = vunpack.c.h.b16 %v167
    %v846 = vunpack.c.l.b16 %v168
    %v847 = vunpack.c.h.b16 %v168
    %v848 = vunpack.c.l.b16 %v169
    %v849 = vunpack.c.h.b16 %v169
    %v850 = vunpack.c.l.b16 %v170
    %v851 = vunpack.c.h.b16 %v170
    %v852 = vunpack.c.l.b16 %v171
    %v853 = vunpack.c.h.b16 %v171
    %v854 = vunpack.c.l.b16 %v172
    %v855 = vunpack.c.h.b16 %v172
    %v856 = vunpack.c.l.b16 %v173
    %v857 = vunpack.c.h.b16 %v173
    %v858 = vunpack.c.l.b16 %v174
    %v859 = vunpack.c.h.b16 %v174
    %v860 = vunpack.c.l.b16 %v175
    %v861 = vunpack.c.h.b16 %v175
    %v862 = vunpack.c.l.b16 %v176
    %v863 = vunpack.c.h.b16 %v176
    %v864 = vunpack.c.l.b16 %v177
    %v865 = vunpack.c.h.b16 %v177
    %v866 = vunpack.c.l.b16 %v178
    %v867 = vunpack.c.h.b16 %v178
    %v868 = vunpack.c.l.b16 %v179
    %v869 = vunpack.c.h.b16 %v179
    %v870 = vunpack.c.l.b16 %v180
    %v871 = vunpack.c.h.b16 %v180
    %v872 = vunpack.c.l.b16 %v181
    %v873 = vunpack.c.h.b16 %v181
    %v874 = vunpack.c.l.b16 %v182
    %v875 = vunpack.c.h.b16 %v182
    %v876 = vunpack.c.l.b16 %v183
    %v877 = vunpack.c.h.b16 %v183
    %v878 = vunpack.c.l.b16 %v184
    %v879 = vunpack.c.h.b16 %v184
    %v880 = vunpack.c.l.b16 %v185
    %v881 = vunpack.c.h.b16 %v185
    %v882 = vunpack.c.l.b16 %v186
    %v883 = vunpack.c.h.b16 %v186
    %v884 = vunpack.c.l.b16 %v187
    %v885 = vunpack.c.h.b16 %v187
    %v886 = vunpack.c.l.b16 %v188
    %v887 = vunpack.c.h.b16 %v188
    %v888 = vunpack.c.l.b16 %v189
    %v889 = vunpack.c.h.b16 %v189
    %v890 = vunpack.c.l.b16 %v190
    %v891 = vunpack.c.h.b16 %v190
    %v892 = vunpack.c.l.b16 %v191
    %v893 = vunpack.c.h.b16 %v191
    %v894 = vunpack.c.l.b16 %v192
    %v895 = vunpack.c.h.b16 %v192
    %v896 = vunpack.c.l.b16 %v193
    %v897 = vunpack.c.h.b16 %v193
    %v898 = vunpack.c.l.b16 %v194
    %v899 = vunpack.c.h.b16 %v194
    %v900 = vunpack.c.l.b16 %v195
    %v901 = vunpack.c.h.b16 %v195
    %v902 = vunpack.c.l.b16 %v196
    %v903 = vunpack.c.h.b16 %v196
    %v904 = vunpack.c.l.b16 %v197
    %v905 = vunpack.c.h.b16 %v197
    %v906 = vunpack.c.l.b16 %v198
    %v907 = vunpack.c.h.b16 %v198
    %v908 = vunpack.c.l.b16 %v199
    %v909 = vunpack.c.h.b16 %v199
    %v910 = vunpack.c.l.b16 %v200
    %v911 = vunpack.c.h.b16 %v200
    %v912 = vunpack.c.l.b16 %v201
    %v913 = vunpack.c.h.b16 %v201
    %v914 = vunpack.c.l.b16 %v202
    %v915 = vunpack.c.h.b16 %v202
    %v916 = vunpack.c.l.b16 %v203
    %v917 = vunpack.c.h.b16 %v203
    %v918 = vunpack.c.l.b16 %v204
    %v919 = vunpack.c.h.b16 %v204
    %v920 = vunpack.c.l.b16 %v205
    %v921 = vunpack.c.h.b16 %v205
    %v922 = vunpack.c.l.b16 %v206
    %v923 = vunpack.c.h.b16 %v206
    %v924 = vunpack.c.l.b16 %v207
    %v925 = vunpack.c.h.b16 %v207
    %v926 = vunpack.c.l.b16 %v208
    %v927 = vunpack.c.h.b16 %v208
    %v928 = vunpack.c.l.b16 %v209
    %v929 = vunpack.c.h.b16 %v209
    %v930 = vunpack.c.l.b16 %v210
    %v931 = vunpack.c.h.b16 %v210
    %v932 = vunpack.c.l.b16 %v211
    %v933 = vunpack.c.h.b16 %v211
    %v934 = vunpack.c.l.b16 %v212
    %v935 = vunpack.c.h.b16 %v212
    %v936 = vunpack.c.l.b16 %v213
    %v937 = vunpack.c.h.b16 %v213
    %v938 = vunpack.c.l.b16 %v214
    %v939 = vunpack.c.h.b16 %v214
    %v940 = vunpack.c.l.b16 %v215
    %v941 = vunpack.c.h.b16 %v215
    %v942 = vunpack.c.l.b16 %v216
    %v943 = vunpack.c.h.b16 %v216
    %v944 = vunpack.c.l.b16 %v217
    %v945 = vunpack.c.h.b16 %v217
    %v946 = vunpack.c.l.b16 %v218
    %v947 = vunpack.c.h.b16 %v218
    %v948 = vunpack.c.l.b16 %v219
    %v949 = vunpack.c.h.b16 %v219
    %v950 = vunpack.c.l.b16 %v220
    %v951 = vunpack.c.h.b16 %v220
    %v952 = vunpack.c.l.b16 %v221
    %v953 = vunpack.c.h.b16 %v221
    %v954 = vunpack.c.l.b16 %v222
    %v955 = vunpack.c.h.b16 %v222
    %v956 = vunpack.c.l.b16 %v223
    %v957 = vunpack.c.h.b16 %v223
    %v958 = vunpack.c.l.b16 %v224
    %v959 = vunpack.c.h.b16 %v224
    %v960 = vunpack.c.l.b16 %v225
    %v961 = vunpack.c.h.b16 %v225
    %v962 = vunpack.c.l.b16 %v226
    %v963 = vunpack.c.h.b16 %v226
    %v964 = vunpack.c.l.b16 %v227
    %v965 = vunpack.c.h.b16 %v227
    %v966 = vunpack.c.l.b16 %v228
    %v967 = vunpack.c.h.b16 %v228
    %v968 = vunpack.c.l.b16 %v229
    %v969 = vunpack.c.h.b16 %v229
    %v970 = vunpack.c.l.b16 %v230
    %v971 = vunpack.c.h.b16 %v230
    %v972 = vunpack.c.l.b16 %v231
    %v973 = vunpack.c.h.b16 %v231
    %v974 = vunpack.c.l.b16 %v232
    %v975 = vunpack.c.h.b16 %v232
    %v976 = vunpack.c.l.b16 %v233
    %v977 = vunpack.c.h.b16 %v233
    %v978 = vunpack.c.l.b16 %v234
    %v979 = vunpack.c.h.b16 %v234
    %v980 = vunpack.c.l.b16 %v235
    %v981 = vunpack.c.h.b16 %v235
    %v982 = vunpack.c.l.b16 %v236
    %v983 = vunpack.c.h.b16 %v236
    %v984 = vunpack.c.l.b16 %v237
    %v985 = vunpack.c.h.b16 %v237
    %v986 = vunpack.c.l.b16 %v238
    %v987 = vunpack.c.h.b16 %v238
    %v988 = vunpack.c.l.b16 %v239
    %v989 = vunpack.c.h.b16 %v239
    %v990 = vunpack.c.l.b16 %v240
    %v991 = vunpack.c.h.b16 %v240
    %v992 = vunpack.c.l.b16 %v241
    %v993 = vunpack.c.h.b16 %v241
    %v994 = vunpack.c.l.b16 %v242
    %v995 = vunpack.c.h.b16 %v242
    %v996 = vunpack.c.l.b16 %v243
    %v997 = vunpack.c.h.b16 %v243
    %v998 = vunpack.c.l.b16 %v244
    %v999 = vunpack.c.h.b16 %v244
    %v1000 = vunpack.c.l.b16 %v245
    %v1001 = vunpack.c.h.b16 %v245
    %v1002 = vunpack.c.l.b16 %v246
    %v1003 = vunpack.c.h.b16 %v246
    %v1004 = vunpack.c.l.b16 %v247
    %v1005 = vunpack.c.h.b16 %v247
    %v1006 = vunpack.c.l.b16 %v248
    %v1007 = vunpack.c.h.b16 %v248
    %v1008 = vunpack.c.l.b16 %v249
    %v1009 = vunpack.c.h.b16 %v249
    %v1010 = vunpack.c.l.b16 %v250
    %v1011 = vunpack.c.h.b16 %v250
    %v1012 = vunpack.c.l.b16 %v251
    %v1013 = vunpack.c.h.b16 %v251
    %v1014 = vunpack.c.l.b16 %v252
    %v1015 = vunpack.c.h.b16 %v252
    %v1016 = vunpack.c.l.b16 %v253
    %v1017 = vunpack.c.h.b16 %v253
    %v1018 = vunpack.c.l.b16 %v254
    %v1019 = vunpack.c.h.b16 %v254
    %v1020 = vunpack.c.l.b16 %v255
    %v1021 = vunpack.c.h.b16 %v255
    %v1022 = vunpack.c.l.b16 %v256
    %v1023 = vunpack.c.h.b16 %v256
    %v1024 = vunpack.c.l.b16 %v257
    %v1025 = vunpack.c.h.b16 %v257
    %v1026 = vunpack.c.l.b16 %v258
    %v1027 = vunpack.c.h.b16 %v258
    %v1028 = vunpack.c.l.b16 %v259
    %v1029 = vunpack.c.h.b16 %v259
    %v1030 = vunpack.c.l.b16 %v260
    %v1031 = vunpack.c.h.b16 %v260
    %v1032 = vunpack.c.l.b16 %v261
    %v1033 = vunpack.c.h.b16 %v261
    %v1034 = vunpack.c.l.b16 %v262
    %v1035 = vunpack.c.h.b16 %v262
    %v1036 = vunpack.c.l.b16 %v263
    %v1037 = vunpack.c.h.b16 %v263
    %v1038 = vunpack.c.l.b16 %v264
    %v1039 = vunpack.c.h.b16 %v264
    %v1040 = vunpack.c.l.b16 %v265
    %v1041 = vunpack.c.h.b16 %v265
    %v1042 = vunpack.c.l.b16 %v266
    %v1043 = vunpack.c.h.b16 %v266
    %v1044 = vunpack.c.l.b16 %v267
    %v1045 = vunpack.c.h.b16 %v267
    %v1046 = vunpack.c.l.b16 %v268
    %v1047 = vunpack.c.h.b16 %v268
    %v1048 = vunpack.c.l.b16 %v269
    %v1049 = vunpack.c.h.b16 %v269
    %v1050 = vunpack.c.l.b16 %v270
    %v1051 = vunpack.c.h.b16 %v270
    %v1052 = vunpack.c.l.b16 %v271
    %v1053 = vunpack.c.h.b16 %v271
    %v1054 = vunpack.c.l.b16 %v272
    %v1055 = vunpack.c.h.b16 %v272
    %v1056 = vunpack.c.l.b16 %v273
    %v1057 = vunpack.c.h.b16 %v273
    %v1058 = vunpack.c.l.b16 %v274
    %v1059 = vunpack.c.h.b16 %v274
    %v1060 = vunpack.c.l.b16 %v275
    %v1061 = vunpack.c.h.b16 %v275
    %v1062 = vunpack.c.l.b16 %v276
    %v1063 = vunpack.c.h.b16 %v276
    %v1064 = vunpack.c.l.b16 %v277
    %v1065 = vunpack.c.h.b16 %v277
    %v1066 = vunpack.c.l.b16 %v278
    %v1067 = vunpack.c.h.b16 %v278
    %v1068 = vunpack.c.l.b16 %v279
    %v1069 = vunpack.c.h.b16 %v279
    %v1070 = vunpack.c.l.b16 %v280
    %v1071 = vunpack.c.h.b16 %v280
    %v1072 = vunpack.c.l.b16 %v281
    %v1073 = vunpack.c.h.b16 %v281
    %v1074 = vunpack.c.l.b16 %v282
    %v1075 = vunpack.c.h.b16 %v282
    %v1076 = vunpack.c.l.b16 %v283
    %v1077 = vunpack.c.h.b16 %v283
    %v1078 = vunpack.c.l.b16 %v284
    %v1079 = vunpack.c.h.b16 %v284
    %v1080 = vunpack.c.l.b16 %v285
    %v1081 = vunpack.c.h.b16 %v285
    %v1082 = vunpack.c.l.b16 %v286
    %v1083 = vunpack.c.h.b16 %v286
    %v1084 = vunpack.c.l.b16 %v287
    %v1085 = vunpack.c.h.b16 %v287
    %v1086 = vunpack.c.l.b16 %v288
    %v1087 = vunpack.c.h.b16 %v288
    %v1088 = vunpack.c.l.b16 %v289
    %v1089 = vunpack.c.h.b16 %v289
    %v1090 = vunpack.c.l.b16 %v290
    %v1091 = vunpack.c.h.b16 %v290
    %v1092 = vunpack.c.l.b16 %v291
    %v1093 = vunpack.c.h.b16 %v291
    %v1094 = vunpack.c.l.b16 %v292
    %v1095 = vunpack.c.h.b16 %v292
    %v1096 = vunpack.c.l.b16 %v293
    %v1097 = vunpack.c.h.b16 %v293
    %v1098 = vunpack.c.l.b16 %v294
    %v1099 = vunpack.c.h.b16 %v294
    %v1100 = vunpack.c.l.b16 %v295
    %v1101 = vunpack.c.h.b16 %v295
    %v1102 = vunpack.c.l.b16 %v296
    %v1103 = vunpack.c.h.b16 %v296
    %v1104 = vunpack.c.l.b16 %v297
    %v1105 = vunpack.c.h.b16 %v297
    %v1106 = vunpack.c.l.b16 %v298
    %v1107 = vunpack.c.h.b16 %v298
    %v1108 = vunpack.c.l.b16 %v299
    %v1109 = vunpack.c.h.b16 %v299
    %v1110 = vunpack.c.l.b16 %v300
    %v1111 = vunpack.c.h.b16 %v300
    %v1112 = vunpack.c.l.b16 %v301
    %v1113 = vunpack.c.h.b16 %v301
    %v1114 = vunpack.c.l.b16 %v302
    %v1115 = vunpack.c.h.b16 %v302
    %v1116 = vunpack.c.l.b16 %v303
    %v1117 = vunpack.c.h.b16 %v303
    %v1118 = vunpack.c.l.b16 %v304
    %v1119 = vunpack.c.h.b16 %v304
    %v1120 = vunpack.c.l.b16 %v305
    %v1121 = vunpack.c.h.b16 %v305
    %v1122 = vunpack.c.l.b16 %v306
    %v1123 = vunpack.c.h.b16 %v306
    %v1124 = vunpack.c.l.b16 %v307
    %v1125 = vunpack.c.h.b16 %v307
    %v1126 = vpack.c.b16 %v618, %v614
    %v1127 = vpack.c.b16 %v619, %v615
    %v1128 = vpack.c.b16 %v620, %v616
    %v1129 = vpack.c.b16 %v621, %v617
    %v1130 = vpack.c.b16 %v626, %v622
    %v1131 = vpack.c.b16 %v627, %v623
    %v1132 = vpack.c.b16 %v628, %v624
    %v1133 = vpack.c.b16 %v629, %v625
    %v1134 = vpack.c.b16 %v634, %v630
    %v1135 = vpack.c.b16 %v635, %v631
    %v1136 = vpack.c.b16 %v636, %v632
    %v1137 = vpack.c.b16 %v637, %v633
    %v1138 = vpack.c.b16 %v642, %v638
    %v1139 = vpack.c.b16 %v643, %v639
    %v1140 = vpack.c.b16 %v644, %v640
    %v1141 = vpack.c.b16 %v645, %v641
    %v1142 = vpack.c.b16 %v650, %v646
    %v1143 = vpack.c.b16 %v651, %v647
    %v1144 = vpack.c.b16 %v652, %v648
    %v1145 = vpack.c.b16 %v653, %v649
    %v1146 = vpack.c.b16 %v658, %v654
    %v1147 = vpack.c.b16 %v659, %v655
    %v1148 = vpack.c.b16 %v660, %v656
    %v1149 = vpack.c.b16 %v661, %v657
    %v1150 = vpack.c.b16 %v666, %v662
    %v1151 = vpack.c.b16 %v667, %v663
    %v1152 = vpack.c.b16 %v668, %v664
    %v1153 = vpack.c.b16 %v669, %v665
    %v1154 = vpack.c.b16 %v674, %v670
    %v1155 = vpack.c.b16 %v675, %v671
    %v1156 = vpack.c.b16 %v676, %v672
    %v1157 = vpack.c.b16 %v677, %v673
    %v1158 = vpack.c.b16 %v682, %v678
    %v1159 = vpack.c.b16 %v683, %v679
    %v1160 = vpack.c.b16 %v684, %v680
    %v1161 = vpack.c.b16 %v685, %v681
    %v1162 = vpack.c.b16 %v690, %v686
    %v1163 = vpack.c.b16 %v691, %v687
    %v1164 = vpack.c.b16 %v692, %v688
    %v1165 = vpack.c.b16 %v693, %v689
    %v1166 = vpack.c.b16 %v698, %v694
    %v1167 = vpack.c.b16 %v699, %v695
    %v1168 = vpack.c.b16 %v700, %v696
    %v1169 = vpack.c.b16 %v701, %v697
    %v1170 = vpack.c.b16 %v706, %v702
    %v1171 = vpack.c.b16 %v707, %v703
    %v1172 = vpack.c.b16 %v708, %v704
    %v1173 = vpack.c.b16 %v709, %v705
    %v1174 = vpack.c.b16 %v714, %v710
    %v1175 = vpack.c.b16 %v715, %v711
    %v1176 = vpack.c.b16 %v716, %v712
    %v1177 = vpack.c.b16 %v717, %v713
    %v1178 = vpack.c.b16 %v722, %v718
    %v1179 = vpack.c.b16 %v723, %v719
    %v1180 = vpack.c.b16 %v724, %v720
    %v1181 = vpack.c.b16 %v725, %v721
    %v1182 = vpack.c.b16 %v730, %v726
    %v1183 = vpack.c.b16 %v731, %v727
    %v1184 = vpack.c.b16 %v732, %v728
    %v1185 = vpack.c.b16 %v733, %v729
    %v1186 = vpack.c.b16 %v738, %v734
    %v1187 = vpack.c.b16 %v739, %v735
    %v1188 = vpack.c.b16 %v740, %v736
    %v1189 = vpack.c.b16 %v741, %v737
    %v1190 = vpack.c.b16 %v746, %v742
    %v1191 = vpack.c.b16 %v747, %v743
    %v1192 = vpack.c.b16 %v748, %v744
    %v1193 = vpack.c.b16 %v749, %v745
    %v1194 = vpack.c.b16 %v754, %v750
    %v1195 = vpack.c.b16 %v755, %v751
    %v1196 = vpack.c.b16 %v756, %v752
    %v1197 = vpack.c.b16 %v757, %v753
    %v1198 = vpack.c.b16 %v762, %v758
    %v1199 = vpack.c.b16 %v763, %v759
    %v1200 = vpack.c.b16 %v764, %v760
    %v1201 = vpack.c.b16 %v765, %v761
    %v1202 = vpack.c.b16 %v770, %v766
    %v1203 = vpack.c.b16 %v771, %v767
    %v1204 = vpack.c.b16 %v772, %v768
    %v1205 = vpack.c.b16 %v773, %v769
    %v1206 = vpack.c.b16 %v778, %v774
    %v1207 = vpack.c.b16 %v779, %v775
    %v1208 = vpack.c.b16 %v780, %v776
    %v1209 = vpack.c.b16 %v781, %v777
    %v1210 = vpack.c.b16 %v786, %v782
    %v1211 = vpack.c.b16 %v787, %v783
    %v1212 = vpack.c.b16 %v788, %v784
    %v1213 = vpack.c.b16 %v789, %v785
    %v1214 = vpack.c.b16 %v794, %v790
    %v1215 = vpack.c.b16 %v795, %v791
    %v1216 = vpack.c.b16 %v796, %v792
    %v1217 = vpack.c.b16 %v797, %v793
    %v1218 = vpack.c.b16 %v802, %v798
    %v1219 = vpack.c.b16 %v803, %v799
    %v1220 = vpack.c.b16 %v804, %v800
    %v1221 = vpack.c.b16 %v805, %v801
    %v1222 = vpack.c.b16 %v810, %v806
    %v1223 = vpack.c.b16 %v811, %v807
    %v1224 = vpack.c.b16 %v812, %v808
    %v1225 = vpack.c.b16 %v813, %v809
    %v1226 = vpack.c.b16 %v818, %v814
    %v1227 = vpack.c.b16 %v819, %v815
    %v1228 = vpack.c.b16 %v820, %v816
    %v1229 = vpack.c.b16 %v821, %v817
    %v1230 = vpack.c.b16 %v826, %v822
    %v1231 = vpack.c.b16 %v827, %v823
    %v1232 = vpack.c.b16 %v828, %v824
    %v1233 = vpack.c.b16 %v829, %v825
    %v1234 = vpack.c.b16 %v834, %v830
    %v1235 = vpack.c.b16 %v835, %v831
    %v1236 = vpack.c.b16 %v836, %v832
    %v1237 = vpack.c.b16 %v837, %v833
    %v1238 = vpack.c.b16 %v842, %v838
    %v1239 = vpack.c.b16 %v843, %v839
    %v1240 = vpack.c.b16 %v844, %v840
    %v1241 = vpack.c.b16 %v845, %v841
    %v1242 = vpack.c.b16 %v850, %v846
    %v1243 = vpack.c.b16 %v851, %v847
    %v1244 = vpack.c.b16 %v852, %v848
    %v1245 = vpack.c.b16 %v853, %v849
    %v1246 = vpack.c.b16 %v858, %v854
    %v1247 = vpack.c.b16 %v859, %v855
    %v1248 = vpack.c.b16 %v860, %v856
    %v1249 = vpack.c.b16 %v861, %v857
    %v1250 = vpack.c.b16 %v866, %v862
    %v1251 = vpack.c.b16 %v867, %v863
    %v1252 = vpack.c.b16 %v868, %v864
    %v1253 = vpack.c.b16 %v869, %v865
    %v1254 = vpack.c.b16 %v874, %v870
    %v1255 = vpack.c.b16 %v875, %v871
    %v1256 = vpack.c.b16 %v876, %v872
    %v1257 = vpack.c.b16 %v877, %v873
    %v1258 = vpack.c.b16 %v882, %v878
    %v1259 = vpack.c.b16 %v883, %v879
    %v1260 = vpack.c.b16 %v884, %v880
    %v1261 = vpack.c.b16 %v885, %v881
    %v1262 = vpack.c.b16 %v890, %v886
    %v1263 = vpack.c.b16 %v891, %v887
    %v1264 = vpack.c.b16 %v892, %v888
    %v1265 = vpack.c.b16 %v893, %v889
    %v1266 = vpack.c.b16 %v898, %v894
    %v1267 = vpack.c.b16 %v899, %v895
    %v1268 = vpack.c.b16 %v900, %v896
    %v1269 = vpack.c.b16 %v901, %v897
    %v1270 = vpack.c.b16 %v906, %v902
    %v1271 = vpack.c.b16 %v907, %v903
    %v1272 = vpack.c.b16 %v908, %v904
    %v1273 = vpack.c.b16 %v909, %v905
    %v1274 = vpack.c.b16 %v914, %v910
    %v1275 = vpack.c.b16 %v915, %v911
    %v1276 = vpack.c.b16 %v916, %v912
    %v1277 = vpack.c.b16 %v917, %v913
    %v1278 = vpack.c.b16 %v922, %v918
    %v1279 = vpack.c.b16 %v923, %v919
    %v1280 = vpack.c.b16 %v924, %v920
    %v1281 = vpack.c.b16 %v925, %v921
    %v1282 = vpack.c.b16 %v930, %v926
    %v1283 = vpack.c.b16 %v931, %v927
    %v1284 = vpack.c.b16 %v932, %v928
    %v1285 = vpack.c.b16 %v933, %v929
    %v1286 = vpack.c.b16 %v938, %v934
    %v1287 = vpack.c.b16 %v939, %v935
    %v1288 = vpack.c.b16 %v940, %v936
    %v1289 = vpack.c.b16 %v941, %v937
    %v1290 = vpack.c.b16 %v946, %v942
    %v1291 = vpack.c.b16 %v947, %v943
    %v1292 = vpack.c.b16 %v948, %v944
    %v1293 = vpack.c.b16 %v949, %v945
    %v1294 = vpack.c.b16 %v954, %v950
    %v1295 = vpack.c.b16 %v955, %v951
    %v1296 = vpack.c.b16 %v956, %v952
    %v1297 = vpack.c.b16 %v957, %v953
    %v1298 = vpack.c.b16 %v962, %v958
    %v1299 = vpack.c.b16 %v963, %v959
    %v1300 = vpack.c.b16 %v964, %v960
    %v1301 = vpack.c.b16 %v965, %v961
    %v1302 = vpack.c.b16 %v970, %v966
    %v1303 = vpack.c.b16 %v971, %v967
    %v1304 = vpack.c.b16 %v972, %v968
    %v1305 = vpack.c.b16 %v973, %v969
    %v1306 = vpack.c.b16 %v978, %v974
    %v1307 = vpack.c.b16 %v979, %v975
    %v1308 = vpack.c.b16 %v980, %v976
    %v1309 = vpack.c.b16 %v981, %v977
    %v1310 = vpack.c.b16 %v986, %v982
    %v1311 = vpack.c.b16 %v987, %v983
    %v1312 = vpack.c.b16 %v988, %v984
    %v1313 = vpack.c.b16 %v989, %v985
    %v1314 = vpack.c.b16 %v994, %v990
    %v1315 = vpack.c.b16 %v995, %v991
    %v1316 = vpack.c.b16 %v996, %v992
    %v1317 = vpack.c.b16 %v997, %v993
    %v1318 = vpack.c.b16 %v1002, %v998
    %v1319 = vpack.c.b16 %v1003, %v999
    %v1320 = vpack.c.b16 %v1004, %v1000
    %v1321 = vpack.c.b16 %v1005, %v1001
    %v1322 = vpack.c.b16 %v1010, %v1006
    %v1323 = vpack.c.b16 %v1011, %v1007
    %v1324 = vpack.c.b16 %v1012, %v1008
    %v1325 = vpack.c.b16 %v1013, %v1009
    %v1326 = vpack.c.b16 %v1018, %v1014
    %v1327 = vpack.c.b16 %v1019, %v1015
    %v1328 = vpack.c.b16 %v1020, %v1016
    %v1329 = vpack.c.b16 %v1021, %v1017
    %v1330 = vpack.c.b16 %v1026, %v1022
    %v1331 = vpack.c.b16 %v1027, %v1023
    %v1332 = vpack.c.b16 %v1028, %v1024
    %v1333 = vpack.c.b16 %v1029, %v1025
    %v1334 = vpack.c.b16 %v1034, %v1030
    %v1335 = vpack.c.b16 %v1035, %v1031
    %v1336 = vpack.c.b16 %v1036, %v1032
    %v1337 = vpack.c.b16 %v1037, %v1033
    %v1338 = vpack.c.b16 %v1042, %v1038
    %v1339 = vpack.c.b16 %v1043, %v1039
    %v1340 = vpack.c.b16 %v1044, %v1040
    %v1341 = vpack.c.b16 %v1045, %v1041
    %v1342 = vpack.c.b16 %v1050, %v1046
    %v1343 = vpack.c.b16 %v1051, %v1047
    %v1344 = vpack.c.b16 %v1052, %v1048
    %v1345 = vpack.c.b16 %v1053, %v1049
    %v1346 = vpack.c.b16 %v1058, %v1054
    %v1347 = vpack.c.b16 %v1059, %v1055
    %v1348 = vpack.c.b16 %v1060, %v1056
    %v1349 = vpack.c.b16 %v1061, %v1057
    %v1350 = vpack.c.b16 %v1066, %v1062
    %v1351 = vpack.c.b16 %v1067, %v1063
    %v1352 = vpack.c.b16 %v1068, %v1064
    %v1353 = vpack.c.b16 %v1069, %v1065
    %v1354 = vpack.c.b16 %v1074, %v1070
    %v1355 = vpack.c.b16 %v1075, %v1071
    %v1356 = vpack.c.b16 %v1076, %v1072
    %v1357 = vpack.c.b16 %v1077, %v1073
    %v1358 = vpack.c.b16 %v1082, %v1078
    %v1359 = vpack.c.b16 %v1083, %v1079
    %v1360 = vpack.c.b16 %v1084, %v1080
    %v1361 = vpack.c.b16 %v1085, %v1081
    %v1362 = vpack.c.b16 %v1090, %v1086
    %v1363 = vpack.c.b16 %v1091, %v1087
    %v1364 = vpack.c.b16 %v1092, %v1088
    %v1365 = vpack.c.b16 %v1093, %v1089
    %v1366 = vpack.c.b16 %v1098, %v1094
    %v1367 = vpack.c.b16 %v1099, %v1095
    %v1368 = vpack.c.b16 %v1100, %v1096
    %v1369 = vpack.c.b16 %v1101, %v1097
    %v1370 = vpack.c.b16 %v1106, %v1102
    %v1371 = vpack.c.b16 %v1107, %v1103
    %v1372 = vpack.c.b16 %v1108, %v1104
    %v1373 = vpack.c.b16 %v1109, %v1105
    %v1374 = vpack.c.b16 %v1114, %v1110
    %v1375 = vpack.c.b16 %v1115, %v1111
    %v1376 = vpack.c.b16 %v1116, %v1112
    %v1377 = vpack.c.b16 %v1117, %v1113
    %v1378 = vpack.c.b16 %v1122, %v1118
    %v1379 = vpack.c.b16 %v1123, %v1119
    %v1380 = vpack.c.b16 %v1124, %v1120
    %v1381 = vpack.c.b16 %v1125, %v1121
    %1638 = vmatprep.subr.bf16.mxu0 %v1127
    %1639 = vmatpush1.bf16.msra.mxu0 %v1126
    %1640 = vmatprep.subr.bf16.mxu0 %v1131
    %1641 = vmatpush1.bf16.msra.mxu0 %v1130
    %1642 = vmatprep.subr.bf16.mxu0 %v1135
    %1643 = vmatpush1.bf16.msra.mxu0 %v1134
    %1644 = vmatprep.subr.bf16.mxu0 %v1139
    %1645 = vmatpush1.bf16.msra.mxu0 %v1138
    %1646 = vmatprep.subr.bf16.mxu0 %v1143
    %1647 = vmatpush1.bf16.msra.mxu0 %v1142
    %1648 = vmatprep.subr.bf16.mxu0 %v1147
    %1649 = vmatpush1.bf16.msra.mxu0 %v1146
    %1650 = vmatprep.subr.bf16.mxu0 %v1151
    %1651 = vmatpush1.bf16.msra.mxu0 %v1150
    %1652 = vmatprep.subr.bf16.mxu0 %v1155
    %1653 = vmatpush1.bf16.msra.mxu0 %v1154
    %1654 = vmatprep.subr.bf16.mxu0 %v1159
    %1655 = vmatpush1.bf16.msra.mxu0 %v1158
    %1656 = vmatprep.subr.bf16.mxu0 %v1163
    %1657 = vmatpush1.bf16.msra.mxu0 %v1162
    %1658 = vmatprep.subr.bf16.mxu0 %v1167
    %1659 = vmatpush1.bf16.msra.mxu0 %v1166
    %1660 = vmatprep.subr.bf16.mxu0 %v1171
    %1661 = vmatpush1.bf16.msra.mxu0 %v1170
    %1662 = vmatprep.subr.bf16.mxu0 %v1175
    %1663 = vmatpush1.bf16.msra.mxu0 %v1174
    %1664 = vmatprep.subr.bf16.mxu0 %v1179
    %1665 = vmatpush1.bf16.msra.mxu0 %v1178
    %1666 = vmatprep.subr.bf16.mxu0 %v1183
    %1667 = vmatpush1.bf16.msra.mxu0 %v1182
    %1668 = vmatprep.subr.bf16.mxu0 %v1187
    %1669 = vmatpush1.bf16.msra.mxu0 %v1186
    %1670 = vmatprep.mubr.bf16.mxu0 %v343
    %1671 = vmatmul.mubr.bf16.gmra.mrb[0].mxu0 %v342
    %v1672 = vpop.f32.mrb[0].mxu0
    %v1673 = vadd.f32 %v313, %v1672
    %v1674 = vpop.f32.mrb[0].mxu0
    %v1675 = vadd.f32 %v317, %v1674
    %v1676 = vpop.f32.mrb[0].mxu0
    %v1677 = vpop.f32.mrb[0].mxu0
    %1678 = vdwg.mxu0
    %1679 = vmatprep.subr.bf16.mxu0 %v1191
    %1680 = vmatpush1.bf16.msra.mxu0 %v1190
    %1681 = vmatprep.subr.bf16.mxu0 %v1195
    %1682 = vmatpush1.bf16.msra.mxu0 %v1194
    %1683 = vmatprep.subr.bf16.mxu0 %v1199
    %1684 = vmatpush1.bf16.msra.mxu0 %v1198
    %1685 = vmatprep.subr.bf16.mxu0 %v1203
    %1686 = vmatpush1.bf16.msra.mxu0 %v1202
    %1687 = vmatprep.subr.bf16.mxu0 %v1207
    %1688 = vmatpush1.bf16.msra.mxu0 %v1206
    %1689 = vmatprep.subr.bf16.mxu0 %v1211
    %1690 = vmatpush1.bf16.msra.mxu0 %v1210
    %1691 = vmatprep.subr.bf16.mxu0 %v1215
    %1692 = vmatpush1.bf16.msra.mxu0 %v1214
    %1693 = vmatprep.subr.bf16.mxu0 %v1219
    %1694 = vmatpush1.bf16.msra.mxu0 %v1218
    %1695 = vmatprep.subr.bf16.mxu0 %v1223
    %1696 = vmatpush1.bf16.msra.mxu0 %v1222
    %1697 = vmatprep.subr.bf16.mxu0 %v1227
    %1698 = vmatpush1.bf16.msra.mxu0 %v1226
    %1699 = vmatprep.subr.bf16.mxu0 %v1231
    %1700 = vmatpush1.bf16.msra.mxu0 %v1230
    %1701 = vmatprep.subr.bf16.mxu0 %v1235
    %1702 = vmatpush1.bf16.msra.mxu0 %v1234
    %1703 = vmatprep.subr.bf16.mxu0 %v1239
    %1704 = vmatpush1.bf16.msra.mxu0 %v1238
    %1705 = vmatprep.subr.bf16.mxu0 %v1243
    %1706 = vmatpush1.bf16.msra.mxu0 %v1242
    %1707 = vmatprep.subr.bf16.mxu0 %v1247
    %1708 = vmatpush1.bf16.msra.mxu0 %v1246
    %1709 = vmatprep.subr.bf16.mxu0 %v1251
    %1710 = vmatpush1.bf16.msra.mxu0 %v1250
    %1711 = vmatprep.mubr.bf16.mxu0 %v345
    %1712 = vmatmul.mubr.bf16.gmra.mrb[0].mxu0 %v344
    %v1713 = vpop.f32.mrb[0].mxu0
    %v1714 = vadd.f32 %v1673, %v1713
    %v1715 = vpop.f32.mrb[0].mxu0
    %v1716 = vadd.f32 %v1675, %v1715
    %v1717 = vpop.f32.mrb[0].mxu0
    %v1718 = vpop.f32.mrb[0].mxu0
    %1719 = vdwg.mxu0
    %1720 = vmatprep.subr.bf16.mxu0 %v1255
    %1721 = vmatpush1.bf16.msra.mxu0 %v1254
    %1722 = vmatprep.subr.bf16.mxu0 %v1259
    %1723 = vmatpush1.bf16.msra.mxu0 %v1258
    %1724 = vmatprep.subr.bf16.mxu0 %v1263
    %1725 = vmatpush1.bf16.msra.mxu0 %v1262
    %1726 = vmatprep.subr.bf16.mxu0 %v1267
    %1727 = vmatpush1.bf16.msra.mxu0 %v1266
    %1728 = vmatprep.subr.bf16.mxu0 %v1271
    %1729 = vmatpush1.bf16.msra.mxu0 %v1270
    %1730 = vmatprep.subr.bf16.mxu0 %v1275
    %1731 = vmatpush1.bf16.msra.mxu0 %v1274
    %1732 = vmatprep.subr.bf16.mxu0 %v1279
    %1733 = vmatpush1.bf16.msra.mxu0 %v1278
    %1734 = vmatprep.subr.bf16.mxu0 %v1283
    %1735 = vmatpush1.bf16.msra.mxu0 %v1282
    %1736 = vmatprep.subr.bf16.mxu0 %v1287
    %1737 = vmatpush1.bf16.msra.mxu0 %v1286
    %1738 = vmatprep.subr.bf16.mxu0 %v1291
    %1739 = vmatpush1.bf16.msra.mxu0 %v1290
    %1740 = vmatprep.subr.bf16.mxu0 %v1295
    %1741 = vmatpush1.bf16.msra.mxu0 %v1294
    %1742 = vmatprep.subr.bf16.mxu0 %v1299
    %1743 = vmatpush1.bf16.msra.mxu0 %v1298
    %1744 = vmatprep.subr.bf16.mxu0 %v1303
    %1745 = vmatpush1.bf16.msra.mxu0 %v1302
    %1746 = vmatprep.subr.bf16.mxu0 %v1307
    %1747 = vmatpush1.bf16.msra.mxu0 %v1306
    %1748 = vmatprep.subr.bf16.mxu0 %v1311
    %1749 = vmatpush1.bf16.msra.mxu0 %v1310
    %1750 = vmatprep.subr.bf16.mxu0 %v1315
    %1751 = vmatpush1.bf16.msra.mxu0 %v1314
    %1752 = vmatprep.mubr.bf16.mxu0 %v347
    %1753 = vmatmul.mubr.bf16.gmra.mrb[0].mxu0 %v346
    %v1754 = vpop.f32.mrb[0].mxu0
    %v1755 = vadd.f32 %v1714, %v1754
    %v1756 = vpop.f32.mrb[0].mxu0
    %v1757 = vadd.f32 %v1716, %v1756
    %v1758 = vpop.f32.mrb[0].mxu0
    %v1759 = vpop.f32.mrb[0].mxu0
    %1760 = vdwg.mxu0
    %1761 = vmatprep.subr.bf16.mxu0 %v1319
    %1762 = vmatpush1.bf16.msra.mxu0 %v1318
    %1763 = vmatprep.subr.bf16.mxu0 %v1323
    %1764 = vmatpush1.bf16.msra.mxu0 %v1322
    %1765 = vmatprep.subr.bf16.mxu0 %v1327
    %1766 = vmatpush1.bf16.msra.mxu0 %v1326
    %1767 = vmatprep.subr.bf16.mxu0 %v1331
    %1768 = vmatpush1.bf16.msra.mxu0 %v1330
    %1769 = vmatprep.subr.bf16.mxu0 %v1335
    %1770 = vmatpush1.bf16.msra.mxu0 %v1334
    %1771 = vmatprep.subr.bf16.mxu0 %v1339
    %1772 = vmatpush1.bf16.msra.mxu0 %v1338
    %1773 = vmatprep.subr.bf16.mxu0 %v1343
    %1774 = vmatpush1.bf16.msra.mxu0 %v1342
    %1775 = vmatprep.subr.bf16.mxu0 %v1347
    %1776 = vmatpush1.bf16.msra.mxu0 %v1346
    %1777 = vmatprep.subr.bf16.mxu0 %v1351
    %1778 = vmatpush1.bf16.msra.mxu0 %v1350
    %1779 = vmatprep.subr.bf16.mxu0 %v1355
    %1780 = vmatpush1.bf16.msra.mxu0 %v1354
    %1781 = vmatprep.subr.bf16.mxu0 %v1359
    %1782 = vmatpush1.bf16.msra.mxu0 %v1358
    %1783 = vmatprep.subr.bf16.mxu0 %v1363
    %1784 = vmatpush1.bf16.msra.mxu0 %v1362
    %1785 = vmatprep.subr.bf16.mxu0 %v1367
    %1786 = vmatpush1.bf16.msra.mxu0 %v1366
    %1787 = vmatprep.subr.bf16.mxu0 %v1371
    %1788 = vmatpush1.bf16.msra.mxu0 %v1370
    %1789 = vmatprep.subr.bf16.mxu0 %v1375
    %1790 = vmatpush1.bf16.msra.mxu0 %v1374
    %1791 = vmatprep.subr.bf16.mxu0 %v1379
    %1792 = vmatpush1.bf16.msra.mxu0 %v1378
    %1793 = vmatprep.mubr.bf16.mxu0 %v349
    %1794 = vmatmul.mubr.bf16.gmra.mrb[0].mxu0 %v348
    %v1795 = vpop.f32.mrb[0].mxu0
    %v1796 = vadd.f32 %v1755, %v1795
    %v1797 = vpop.f32.mrb[0].mxu0
    %v1798 = vadd.f32 %v1757, %v1797
    %v1799 = vpop.f32.mrb[0].mxu0
    %v1800 = vpop.f32.mrb[0].mxu0
    %1801 = vdwg.mxu0
    %1802 = vmatprep.subr.bf16.mxu0 %v1129
    %1803 = vmatpush1.bf16.msra.mxu0 %v1128
    %1804 = vmatprep.subr.bf16.mxu0 %v1133
    %1805 = vmatpush1.bf16.msra.mxu0 %v1132
    %1806 = vmatprep.subr.bf16.mxu0 %v1137
    %1807 = vmatpush1.bf16.msra.mxu0 %v1136
    %1808 = vmatprep.subr.bf16.mxu0 %v1141
    %1809 = vmatpush1.bf16.msra.mxu0 %v1140
    %1810 = vmatprep.subr.bf16.mxu0 %v1145
    %1811 = vmatpush1.bf16.msra.mxu0 %v1144
    %1812 = vmatprep.subr.bf16.mxu0 %v1149
    %1813 = vmatpush1.bf16.msra.mxu0 %v1148
    %1814 = vmatprep.subr.bf16.mxu0 %v1153
    %1815 = vmatpush1.bf16.msra.mxu0 %v1152
    %1816 = vmatprep.subr.bf16.mxu0 %v1157
    %1817 = vmatpush1.bf16.msra.mxu0 %v1156
    %1818 = vmatprep.subr.bf16.mxu0 %v1161
    %1819 = vmatpush1.bf16.msra.mxu0 %v1160
    %1820 = vmatprep.subr.bf16.mxu0 %v1165
    %1821 = vmatpush1.bf16.msra.mxu0 %v1164
    %1822 = vmatprep.subr.bf16.mxu0 %v1169
    %1823 = vmatpush1.bf16.msra.mxu0 %v1168
    %1824 = vmatprep.subr.bf16.mxu0 %v1173
    %1825 = vmatpush1.bf16.msra.mxu0 %v1172
    %1826 = vmatprep.subr.bf16.mxu0 %v1177
    %1827 = vmatpush1.bf16.msra.mxu0 %v1176
    %1828 = vmatprep.subr.bf16.mxu0 %v1181
    %1829 = vmatpush1.bf16.msra.mxu0 %v1180
    %1830 = vmatprep.subr.bf16.mxu0 %v1185
    %1831 = vmatpush1.bf16.msra.mxu0 %v1184
    %1832 = vmatprep.subr.bf16.mxu0 %v1189
    %1833 = vmatpush1.bf16.msra.mxu0 %v1188
    %1834 = vmatprep.mubr.bf16.mxu0 %v343
    %1835 = vmatmul.mubr.bf16.gmra.mrb[0].mxu0 %v342
    %v1836 = vpop.f32.mrb[0].mxu0
    %v1837 = vadd.f32 %v321, %v1836
    %v1838 = vpop.f32.mrb[0].mxu0
    %v1839 = vadd.f32 %v325, %v1838
    %v1840 = vpop.f32.mrb[0].mxu0
    %v1841 = vpop.f32.mrb[0].mxu0
    %1842 = vdwg.mxu0
    %1843 = vmatprep.subr.bf16.mxu0 %v1193
    %1844 = vmatpush1.bf16.msra.mxu0 %v1192
    %1845 = vmatprep.subr.bf16.mxu0 %v1197
    %1846 = vmatpush1.bf16.msra.mxu0 %v1196
    %1847 = vmatprep.subr.bf16.mxu0 %v1201
    %1848 = vmatpush1.bf16.msra.mxu0 %v1200
    %1849 = vmatprep.subr.bf16.mxu0 %v1205
    %1850 = vmatpush1.bf16.msra.mxu0 %v1204
    %1851 = vmatprep.subr.bf16.mxu0 %v1209
    %1852 = vmatpush1.bf16.msra.mxu0 %v1208
    %1853 = vmatprep.subr.bf16.mxu0 %v1213
    %1854 = vmatpush1.bf16.msra.mxu0 %v1212
    %1855 = vmatprep.subr.bf16.mxu0 %v1217
    %1856 = vmatpush1.bf16.msra.mxu0 %v1216
    %1857 = vmatprep.subr.bf16.mxu0 %v1221
    %1858 = vmatpush1.bf16.msra.mxu0 %v1220
    %1859 = vmatprep.subr.bf16.mxu0 %v1225
    %1860 = vmatpush1.bf16.msra.mxu0 %v1224
    %1861 = vmatprep.subr.bf16.mxu0 %v1229
    %1862 = vmatpush1.bf16.msra.mxu0 %v1228
    %1863 = vmatprep.subr.bf16.mxu0 %v1233
    %1864 = vmatpush1.bf16.msra.mxu0 %v1232
    %1865 = vmatprep.subr.bf16.mxu0 %v1237
    %1866 = vmatpush1.bf16.msra.mxu0 %v1236
    %1867 = vmatprep.subr.bf16.mxu0 %v1241
    %1868 = vmatpush1.bf16.msra.mxu0 %v1240
    %1869 = vmatprep.subr.bf16.mxu0 %v1245
    %1870 = vmatpush1.bf16.msra.mxu0 %v1244
    %1871 = vmatprep.subr.bf16.mxu0 %v1249
    %1872 = vmatpush1.bf16.msra.mxu0 %v1248
    %1873 = vmatprep.subr.bf16.mxu0 %v1253
    %1874 = vmatpush1.bf16.msra.mxu0 %v1252
    %1875 = vmatprep.mubr.bf16.mxu0 %v345
    %1876 = vmatmul.mubr.bf16.gmra.mrb[0].mxu0 %v344
    %v1877 = vpop.f32.mrb[0].mxu0
    %v1878 = vadd.f32 %v1837, %v1877
    %v1879 = vpop.f32.mrb[0].mxu0
    %v1880 = vadd.f32 %v1839, %v1879
    %v1881 = vpop.f32.mrb[0].mxu0
    %v1882 = vpop.f32.mrb[0].mxu0
    %1883 = vdwg.mxu0
    %1884 = vmatprep.subr.bf16.mxu0 %v1257
    %1885 = vmatpush1.bf16.msra.mxu0 %v1256
    %1886 = vmatprep.subr.bf16.mxu0 %v1261
    %1887 = vmatpush1.bf16.msra.mxu0 %v1260
    %1888 = vmatprep.subr.bf16.mxu0 %v1265
    %1889 = vmatpush1.bf16.msra.mxu0 %v1264
    %1890 = vmatprep.subr.bf16.mxu0 %v1269
    %1891 = vmatpush1.bf16.msra.mxu0 %v1268
    %1892 = vmatprep.subr.bf16.mxu0 %v1273
    %1893 = vmatpush1.bf16.msra.mxu0 %v1272
    %1894 = vmatprep.subr.bf16.mxu0 %v1277
    %1895 = vmatpush1.bf16.msra.mxu0 %v1276
    %1896 = vmatprep.subr.bf16.mxu0 %v1281
    %1897 = vmatpush1.bf16.msra.mxu0 %v1280
    %1898 = vmatprep.subr.bf16.mxu0 %v1285
    %1899 = vmatpush1.bf16.msra.mxu0 %v1284
    %1900 = vmatprep.subr.bf16.mxu0 %v1289
    %1901 = vmatpush1.bf16.msra.mxu0 %v1288
    %1902 = vmatprep.subr.bf16.mxu0 %v1293
    %1903 = vmatpush1.bf16.msra.mxu0 %v1292
    %1904 = vmatprep.subr.bf16.mxu0 %v1297
    %1905 = vmatpush1.bf16.msra.mxu0 %v1296
    %1906 = vmatprep.subr.bf16.mxu0 %v1301
    %1907 = vmatpush1.bf16.msra.mxu0 %v1300
    %1908 = vmatprep.subr.bf16.mxu0 %v1305
    %1909 = vmatpush1.bf16.msra.mxu0 %v1304
    %1910 = vmatprep.subr.bf16.mxu0 %v1309
    %1911 = vmatpush1.bf16.msra.mxu0 %v1308
    %1912 = vmatprep.subr.bf16.mxu0 %v1313
    %1913 = vmatpush1.bf16.msra.mxu0 %v1312
    %1914 = vmatprep.subr.bf16.mxu0 %v1317
    %1915 = vmatpush1.bf16.msra.mxu0 %v1316
    %1916 = vmatprep.mubr.bf16.mxu0 %v347
    %1917 = vmatmul.mubr.bf16.gmra.mrb[0].mxu0 %v346
    %v1918 = vpop.f32.mrb[0].mxu0
    %v1919 = vadd.f32 %v1878, %v1918
    %v1920 = vpop.f32.mrb[0].mxu0
    %v1921 = vadd.f32 %v1880, %v1920
    %v1922 = vpop.f32.mrb[0].mxu0
    %v1923 = vpop.f32.mrb[0].mxu0
    %1924 = vdwg.mxu0
    %1925 = vmatprep.subr.bf16.mxu0 %v1321
    %1926 = vmatpush1.bf16.msra.mxu0 %v1320
    %1927 = vmatprep.subr.bf16.mxu0 %v1325
    %1928 = vmatpush1.bf16.msra.mxu0 %v1324
    %1929 = vmatprep.subr.bf16.mxu0 %v1329
    %1930 = vmatpush1.bf16.msra.mxu0 %v1328
    %1931 = vmatprep.subr.bf16.mxu0 %v1333
    %1932 = vmatpush1.bf16.msra.mxu0 %v1332
    %1933 = vmatprep.subr.bf16.mxu0 %v1337
    %1934 = vmatpush1.bf16.msra.mxu0 %v1336
    %1935 = vmatprep.subr.bf16.mxu0 %v1341
    %1936 = vmatpush1.bf16.msra.mxu0 %v1340
    %1937 = vmatprep.subr.bf16.mxu0 %v1345
    %1938 = vmatpush1.bf16.msra.mxu0 %v1344
    %1939 = vmatprep.subr.bf16.mxu0 %v1349
    %1940 = vmatpush1.bf16.msra.mxu0 %v1348
    %1941 = vmatprep.subr.bf16.mxu0 %v1353
    %1942 = vmatpush1.bf16.msra.mxu0 %v1352
    %1943 = vmatprep.subr.bf16.mxu0 %v1357
    %1944 = vmatpush1.bf16.msra.mxu0 %v1356
    %1945 = vmatprep.subr.bf16.mxu0 %v1361
    %1946 = vmatpush1.bf16.msra.mxu0 %v1360
    %1947 = vmatprep.subr.bf16.mxu0 %v1365
    %1948 = vmatpush1.bf16.msra.mxu0 %v1364
    %1949 = vmatprep.subr.bf16.mxu0 %v1369
    %1950 = vmatpush1.bf16.msra.mxu0 %v1368
    %1951 = vmatprep.subr.bf16.mxu0 %v1373
    %1952 = vmatpush1.bf16.msra.mxu0 %v1372
    %1953 = vmatprep.subr.bf16.mxu0 %v1377
    %1954 = vmatpush1.bf16.msra.mxu0 %v1376
    %1955 = vmatprep.subr.bf16.mxu0 %v1381
    %1956 = vmatpush1.bf16.msra.mxu0 %v1380
    %1957 = vmatprep.mubr.bf16.mxu0 %v349
    %1958 = vmatmul.mubr.bf16.gmra.mrb[0].mxu0 %v348
    %v1959 = vpop.f32.mrb[0].mxu0
    %v1960 = vadd.f32 %v1919, %v1959
    %v1961 = vpop.f32.mrb[0].mxu0
    %v1962 = vadd.f32 %v1921, %v1961
    %v1963 = vpop.f32.mrb[0].mxu0
    %v1964 = vpop.f32.mrb[0].mxu0
    %1965 = vdwg.mxu0
    %v1966 = vmax.f32 %v1796, 0.0
    %v1967 = vmax.f32 %v1798, 0.0
    %v1968 = vmax.f32 %v1960, 0.0
    %v1969 = vmax.f32 %v1962, 0.0
    %v1970 = vld [vmem:[%s3] sm:$0xf]
    %v1972 = vlaneseq
    %v1973 = vshrl.u32 %v1972, 7
    %v1974 = vsub.s32 0, %v1973
    %v1975 = vrot.slane %v1970, %v1974
    %v1976 = vlaneseq
    %v1977 = vshrl.u32 %v1976, 7
    %v1978 = vsub.s32 1, %v1977
    %v1979 = vrot.slane %v1970, %v1978
    %v1980 = vlaneseq
    %v1981 = vshrl.u32 %v1980, 7
    %v1982 = vsub.s32 2, %v1981
    %v1983 = vrot.slane %v1970, %v1982
    %v1984 = vlaneseq
    %v1985 = vshrl.u32 %v1984, 7
    %v1986 = vsub.s32 3, %v1985
    %v1987 = vrot.slane %v1970, %v1986
    %v1992 = vmul.f32 %v1966, %v1975
    %v1993 = vmul.f32 %v1967, %v1979
    %v1994 = vmul.f32 %v1968, %v1983
    %v1995 = vmul.f32 %v1969, %v1987
    %v1996 = vadd.f32 %v1992, %v1993
    %v1997 = vadd.f32 %v1996, %v1994
    %v1998 = vadd.f32 %v1997, %v1995
    %1999 = vadd.xlane.f32.xlu0 %v1998
    %v2000 = vpop.xlane.xlu0 %1999
    %v2001 = vld [vmem:[#allocation2] sm:$0x1]
    %v2003 = vlaneseq
    %v2004 = vshrl.u32 %v2003, 7
    %v2005 = vsub.s32 0, %v2004
    %v2006 = vrot.slane %v2001, %v2005
    %v2008 = vadd.f32 %v2000, %v2006
    %v2009 = vxor.u32 %v2008, 2147483648
    %v2010 = vmul.f32 %v2009, 1.442695
    %v2011 = vpow.pop %v2010
    %v2012 = vadd.f32 %v2011, 1.0
    %v2013 = vrcp.pop %v2012
    %v2014 = vmul.f32 1.0, %v2013
    %vm2015 = vcmask 7168
    %2016 = vst.msk [vmem:[%s5] sm:$0xff] %vm2015, %v2014
    // Predicated region
    $region30: #{tpu_custom_call.1} parent=1 // pred_check
      _
    $region31: #{tpu_custom_call.1} parent=1 // pred_check_branch
      %2018 = sbr.rel (0) target = $region33
    $region32: #{tpu_custom_call.1} parent=1 // pred_region
      _
    $region33: #{tpu_custom_call.1} parent=1 // pred_fallthru
      _
    // Predicated region
    $region34: #{tpu_custom_call.1} parent=1 // pred_check
      _
    $region35: #{tpu_custom_call.1} parent=1 // pred_check_branch
      %2020 = sbr.rel (0) target = $region37
    $region36: #{tpu_custom_call.1} parent=1 // pred_region
      _
    $region37: #{tpu_custom_call.1} parent=1 // pred_fallthru
      _
    %2021 = vsyncpa [#allocation4], 1
    %2022 = vsyncpa [#allocation6], 1

</llo_original>
